<compile_context>
chip_gen: v7x
topology: tpu7x:2x2x1
jax: 0.10.0
libtpu: 0.0.40
codegen_flags: <defaults>
</compile_context>

<pallas_src>
import math

import numpy as np
import jax
import jax.numpy as jnp
from jax.experimental import pallas as pl
from jax.experimental.pallas import tpu as pltpu


# ----------------------------------------------------------------------------
# In-kernel math helpers (erf approximation, max abs err ~1.5e-7 ~= f32-exact,
# matches nn.GELU(); exp goes to the EUP slot).
# ----------------------------------------------------------------------------
def _erf(x):
    # Abramowitz & Stegun 7.1.26
    a1, a2, a3, a4, a5 = 0.254829592, -0.284496736, 1.421413741, -1.453152027, 1.061405429
    p = 0.3275911
    sign = jnp.where(x >= 0.0, 1.0, -1.0)
    ax = jnp.abs(x)
    t = 1.0 / (1.0 + p * ax)
    poly = ((((a5 * t + a4) * t + a3) * t + a2) * t + a1) * t
    return sign * (1.0 - poly * jnp.exp(-ax * ax))


def _gelu(x):
    return 0.5 * x * (1.0 + _erf(x * (1.0 / math.sqrt(2.0))))


def _row_tile(M, max_tile=512):
    """Row tile for matmul grids: multiple of 8, <= max_tile, and >=2 grid
    blocks whenever M allows (keeps both v7x TensorCores busy)."""
    if M <= 8:
        return M
    tm = min(max_tile, M)
    if tm == M:
        half = (((M + 1) // 2) + 7) // 8 * 8
        if half < M:
            tm = half
    return tm


def _avgpool_weights(L, kernel_size):
    """(L, L) AvgPool1d weight matrix with replicate padding folded in:
    moving_avg(s) = A @ s.  Vectorized construction (no O(L^2) Python loop)."""
    if kernel_size % 2 != 1:
        raise ValueError("series decomposition requires odd kernel_size")
    pad = (kernel_size - 1) // 2
    t = np.arange(L)[:, None]
    taps = np.arange(-pad, pad + 1)[None, :]
    u = np.clip(t + taps, 0, L - 1)                       # (L, k) source indices
    A = np.zeros((L, L), dtype=np.float32)
    np.add.at(A, (np.broadcast_to(t, u.shape), u), 1.0)   # duplicates accumulate (edges)
    return jnp.asarray(A / float(kernel_size))


# ----------------------------------------------------------------------------
# Kernel 1: fused QKV projection, three lane-separate outputs.
# ----------------------------------------------------------------------------
def _qkv_kernel(x_ref, w_ref, b_ref, q_ref, k_ref, v_ref):
    E = q_ref.shape[-1]
    acc = jnp.dot(x_ref[...], w_ref[...], preferred_element_type=jnp.float32) + b_ref[...]
    q_ref[...] = acc[:, :E].astype(q_ref.dtype)
    k_ref[...] = acc[:, E:2 * E].astype(k_ref.dtype)
    v_ref[...] = acc[:, 2 * E:].astype(v_ref.dtype)


def _fused_qkv(x2d, wqkv, bqkv, E):
    M = x2d.shape[0]
    E3 = wqkv.shape[1]
    tm = _row_tile(M)
    out_sd = jax.ShapeDtypeStruct((M, E), x2d.dtype)
    return pl.pallas_call(
        _qkv_kernel,
        out_shape=(out_sd, out_sd, out_sd),
        grid=(pl.cdiv(M, tm),),
        in_specs=[
            pl.BlockSpec((tm, E), lambda i: (i, 0)),
            pl.BlockSpec((E, E3), lambda i: (0, 0)),     # resident fused weight
            pl.BlockSpec((1, E3), lambda i: (0, 0)),
        ],
        out_specs=(
            pl.BlockSpec((tm, E), lambda i: (i, 0)),
            pl.BlockSpec((tm, E), lambda i: (i, 0)),
            pl.BlockSpec((tm, E), lambda i: (i, 0)),
        ),
        compiler_params=pltpu.CompilerParams(dimension_semantics=("parallel",)),
    )(x2d, wqkv, bqkv.reshape(1, E3))


# ----------------------------------------------------------------------------
# Kernel 2: top-k delay aggregation + out-projection + residual + series decomp
# fused, one batch element per grid step (delays via scalar prefetch in SMEM).
# ----------------------------------------------------------------------------
def _make_delay_outproj_decomp_kernel(top_k):
    def kernel(idx_ref, x_ref, v_ref, corr_ref, wo_ref, bo_ref, a_ref, o_ref, vv_ref):
        L = v_ref.shape[1]
        v = v_ref[0].astype(jnp.float32)
        # doubled copy so a dynamic (idx : idx+L) slice == roll(v, -idx, axis=0)
        vv_ref[:L, :] = v
        vv_ref[L:, :] = v
        cvec = corr_ref[0]                                  # (1, top_k) softmax weights
        acc = jnp.zeros(v.shape, jnp.float32)
        for k in range(top_k):                              # static unroll, top_k = O(log L)
            shift = idx_ref[k]                              # dynamic delay from SMEM
            acc = acc + cvec[:, k:k + 1] * vv_ref[pl.ds(shift, L), :]
        attn = jnp.dot(acc, wo_ref[...], preferred_element_type=jnp.float32) + bo_ref[...]
        s = x_ref[0].astype(jnp.float32) + attn             # residual add
        seasonal = s - jnp.dot(a_ref[...], s, preferred_element_type=jnp.float32)
        o_ref[0] = seasonal.astype(o_ref.dtype)
    return kernel


def _delay_agg_outproj_decomp(x, v, index, tmp_corr, wo, bo, A):
    B, L, E = x.shape
    top_k = index.shape[0]
    corr3 = tmp_corr.reshape(B, 1, top_k)
    kernel = _make_delay_outproj_decomp_kernel(top_k)
    return pl.pallas_call(
        kernel,
        out_shape=jax.ShapeDtypeStruct((B, L, E), x.dtype),
        grid_spec=pltpu.PrefetchScalarGridSpec(
            num_scalar_prefetch=1,
            grid=(B,),
            in_specs=[
                pl.BlockSpec((1, L, E), lambda b, idx: (b, 0, 0)),       # x
                pl.BlockSpec((1, L, E), lambda b, idx: (b, 0, 0)),       # v
                pl.BlockSpec((1, 1, top_k), lambda b, idx: (b, 0, 0)),   # softmax weights
                pl.BlockSpec((E, E), lambda b, idx: (0, 0)),             # wo (resident)
                pl.BlockSpec((1, E), lambda b, idx: (0, 0)),             # bo
                pl.BlockSpec((L, L), lambda b, idx: (0, 0)),             # AvgPool matrix
            ],
            out_specs=pl.BlockSpec((1, L, E), lambda b, idx: (b, 0, 0)),
            scratch_shapes=[pltpu.VMEM((2 * L, E), jnp.float32)],
        ),
        compiler_params=pltpu.CompilerParams(dimension_semantics=("parallel",)),
    )(index, x, v, corr3, wo, bo.reshape(1, E), A)


# ----------------------------------------------------------------------------
# Kernel 3: feed-forward + residual + series decomp + special seasonal
# LayerNorm (LN(x) - mean_seq(LN(x))), fused, one batch element per grid step.
# ----------------------------------------------------------------------------
def _ff_decomp_ln_kernel(x_ref, w1_ref, b1_ref, w2_ref, b2_ref, a_ref, g_ref, bt_ref, o_ref):
    eps = 1e-5
    s1 = x_ref[0].astype(jnp.float32)
    h = jnp.dot(s1, w1_ref[...], preferred_element_type=jnp.float32) + b1_ref[...]
    h = _gelu(h)
    ff = jnp.dot(h, w2_ref[...], preferred_element_type=jnp.float32) + b2_ref[...]
    s = s1 + ff                                              # residual add
    seasonal = s - jnp.dot(a_ref[...], s, preferred_element_type=jnp.float32)
    mu = jnp.mean(seasonal, axis=-1, keepdims=True)
    var = jnp.mean((seasonal - mu) * (seasonal - mu), axis=-1, keepdims=True)
    xhat = (seasonal - mu) * jax.lax.rsqrt(var + eps)
    xhat = xhat * g_ref[...] + bt_ref[...]
    bias = jnp.mean(xhat, axis=0, keepdims=True)             # mean over seq positions
    o_ref[0] = (xhat - bias).astype(o_ref.dtype)


def _ff_decomp_layernorm(x1, w1, b1, w2, b2, gamma, beta, A):
    B, L, E = x1.shape
    Hd = w1.shape[1]
    return pl.pallas_call(
        _ff_decomp_ln_kernel,
        out_shape=jax.ShapeDtypeStruct((B, L, E), x1.dtype),
        grid=(B,),
        in_specs=[
            pl.BlockSpec((1, L, E), lambda b: (b, 0, 0)),
            pl.BlockSpec((E, Hd), lambda b: (0, 0)),         # resident FF weights
            pl.BlockSpec((1, Hd), lambda b: (0, 0)),
            pl.BlockSpec((Hd, E), lambda b: (0, 0)),
            pl.BlockSpec((1, E), lambda b: (0, 0)),
            pl.BlockSpec((L, L), lambda b: (0, 0)),           # AvgPool matrix
            pl.BlockSpec((1, E), lambda b: (0, 0)),           # gamma
            pl.BlockSpec((1, E), lambda b: (0, 0)),           # beta
        ],
        out_specs=pl.BlockSpec((1, L, E), lambda b: (b, 0, 0)),
        compiler_params=pltpu.CompilerParams(dimension_semantics=("parallel",)),
    )(x1, w1, b1.reshape(1, Hd), w2, b2.reshape(1, E), A,
      gamma.reshape(1, E), beta.reshape(1, E))


# ----------------------------------------------------------------------------
# AutoCorrelation front half: fused QKV (Pallas) + FFT correlation / top-k
# delay selection (plain JAX).  Returns v and the delay weights/indices that
# kernel 2 consumes.
# ----------------------------------------------------------------------------
def _auto_correlation_context(x, p, n_heads, corr_factor):
    B, L, E = x.shape
    H = n_heads
    d = E // H
    M = B * L
    x2d = x.reshape(M, E)

    wqkv = jnp.concatenate([p["wq"], p["wk"], p["wv"]], axis=1)
    bqkv = jnp.concatenate([p["bq"], p["bk"], p["bv"]], axis=0)
    q2d, k2d, v2d = _fused_qkv(x2d, wqkv, bqkv, E)

    q = q2d.reshape(B, L, H, d)
    k = k2d.reshape(B, L, H, d)

    # TODO(synk): FFT-based period correlation has no Pallas TPU equivalent; plain JAX.
    q_fft = jnp.fft.rfft(q, axis=1)
    k_fft = jnp.fft.rfft(k, axis=1)
    corr = jnp.fft.irfft(q_fft * jnp.conj(k_fft), n=L, axis=1)      # (B, L, H, d)

    # Batch-shared top-k delay selection (Autoformer 'training'/batch-shared path).
    top_k = min(L, max(1, int(corr_factor * math.log(L))))
    mean_value = jnp.mean(corr, axis=(2, 3))                         # (B, L)
    _, index = jax.lax.top_k(jnp.mean(mean_value, axis=0), top_k)    # (top_k,)
    weights = jnp.take(mean_value, index, axis=1)                    # (B, top_k)
    tmp_corr = jax.nn.softmax(weights, axis=-1)
    return v2d.reshape(B, L, E), index.astype(jnp.int32), tmp_corr


# ----------------------------------------------------------------------------
# EncoderBlock forward (dropout layers are identity in eval mode)
# ----------------------------------------------------------------------------
def encoder_block_forward(x, params, *, n_heads, kernel_size, corr_factor):
    B, L, E = x.shape
    A = _avgpool_weights(L, kernel_size)
    v, index, tmp_corr = _auto_correlation_context(x, params, n_heads, corr_factor)
    # x1 = seasonal(x + out_proj(delay_agg(v)))            — one fused HBM pass
    x1 = _delay_agg_outproj_decomp(x, v, index, tmp_corr, params["wo"], params["bo"], A)
    # out = LN(seasonal(x1 + FF(x1))) - mean_seq(LN(...))  — one fused HBM pass
    return _ff_decomp_layernorm(x1, params["w1"], params["b1"], params["w2"], params["b2"],
                                params["gamma"], params["beta"], A)


# ----------------------------------------------------------------------------
# Deterministic parameter init (PyTorch nn.Linear-style uniform init)
# ----------------------------------------------------------------------------
def _init_linear(key, fan_in, fan_out):
    k1, k2 = jax.random.split(key)
    bound = 1.0 / math.sqrt(fan_in)
    w = jax.random.uniform(k1, (fan_in, fan_out), jnp.float32, -bound, bound)
    b = jax.random.uniform(k2, (fan_out,), jnp.float32, -bound, bound)
    return w, b


def init_params(key, embed_dim, expanse_dim):
    keys = jax.random.split(key, 6)
    wq, bq = _init_linear(keys[0], embed_dim, embed_dim)
    wk, bk = _init_linear(keys[1], embed_dim, embed_dim)
    wv, bv = _init_linear(keys[2], embed_dim, embed_dim)
    wo, bo = _init_linear(keys[3], embed_dim, embed_dim)
    w1, b1 = _init_linear(keys[4], embed_dim, expanse_dim)
    w2, b2 = _init_linear(keys[5], expanse_dim, embed_dim)
    return {
        "wq": wq, "bq": bq, "wk": wk, "bk": bk, "wv": wv, "bv": bv,
        "wo": wo, "bo": bo,
        "w1": w1, "b1": b1, "w2": w2, "b2": b2,
        "gamma": jnp.ones((embed_dim,), jnp.float32),   # nn.LayerNorm default init
        "beta": jnp.zeros((embed_dim,), jnp.float32),
    }


if __name__ == "__main__":
    # Small shapes consistent with the module's forward: (batch, seq, embed)
    B, L, E = 2, 16, 32
    N_HEADS = 4
    EXPANSE = 64
    KERNEL_SIZE = 5          # odd, as required for shape-preserving series decomposition
    CORR_FACTOR = 1.0
    # dropout = 0.0 / eval-mode -> identity

    key = jax.random.PRNGKey(0)
    k_x, k_p = jax.random.split(key)
    x = jax.random.normal(k_x, (B, L, E), jnp.float32)
    params = init_params(k_p, E, EXPANSE)

    fwd = jax.jit(
        lambda xx: encoder_block_forward(
            xx, params, n_heads=N_HEADS, kernel_size=KERNEL_SIZE, corr_factor=CORR_FACTOR
        )
    )
    out = fwd(x)
    jax.block_until_ready(out)
    assert out.shape == (B, L, E) and out.dtype == jnp.float32
    assert bool(jnp.all(jnp.isfinite(out)))
    print("KERNEL_OK")
</pallas_src>

<mosaic_0001>
module attributes {stable_mosaic.version = 11 : i64} {
  func.func @_qkv_kernel(%arg0: i32, %arg1: memref<16x32xf32, #tpu.memory_space<vmem>>, %arg2: memref<32x96xf32, #tpu.memory_space<vmem>>, %arg3: memref<1x96xf32, #tpu.memory_space<vmem>>, %arg4: memref<16x32xf32, #tpu.memory_space<vmem>>, %arg5: memref<16x32xf32, #tpu.memory_space<vmem>>, %arg6: memref<16x32xf32, #tpu.memory_space<vmem>>) attributes {dimension_semantics = [#tpu.dimension_semantics<parallel>], iteration_bounds = array<i64: 2>, scalar_prefetch = 0 : i64, scratch_operands = 0 : i64, tpu.core_type = #tpu.core_type<tc>, window_params = [{transform_indices = @transform_0, window_bounds = array<i64: 16, 32>}, {pipeline_mode = #tpu.pipeline_mode<synchronous>, transform_indices = @transform_1, window_bounds = array<i64: 32, 96>}, {pipeline_mode = #tpu.pipeline_mode<synchronous>, transform_indices = @transform_2, window_bounds = array<i64: 1, 96>}, {transform_indices = @transform_3, window_bounds = array<i64: 16, 32>}, {transform_indices = @transform_4, window_bounds = array<i64: 16, 32>}, {transform_indices = @transform_5, window_bounds = array<i64: 16, 32>}]} {
    %c0 = arith.constant 0 : index
    %c0_0 = arith.constant 0 : index
    %0 = vector.load %arg1[%c0, %c0_0] : memref<16x32xf32, #tpu.memory_space<vmem>>, vector<16x32xf32>
    %c0_1 = arith.constant 0 : index
    %c0_2 = arith.constant 0 : index
    %1 = vector.load %arg2[%c0_1, %c0_2] : memref<32x96xf32, #tpu.memory_space<vmem>>, vector<32x96xf32>
    %cst = arith.constant dense<0.000000e+00> : vector<16x96xf32>
    %2 = tpu.matmul %0, %1, %cst {dimension_numbers = #tpu.dot_dimension_numbers<[1], [0], [0], [1], [0, 0, 1, 1], [], []>} : vector<16x32xf32>, vector<32x96xf32>, vector<16x96xf32> -> vector<16x96xf32>
    %c0_3 = arith.constant 0 : index
    %c0_4 = arith.constant 0 : index
    %3 = vector.load %arg3[%c0_3, %c0_4] : memref<1x96xf32, #tpu.memory_space<vmem>>, vector<1x96xf32>
    %4 = vector.broadcast %3 : vector<1x96xf32> to vector<16x96xf32>
    %5 = arith.addf %2, %4 : vector<16x96xf32>
    %6 = vector.extract_strided_slice %5 {offsets = [0, 0], sizes = [16, 32], strides = [1, 1]} : vector<16x96xf32> to vector<16x32xf32>
    %c0_5 = arith.constant 0 : index
    %c0_6 = arith.constant 0 : index
    %7 = vector.load %arg4[%c0_5, %c0_6] : memref<16x32xf32, #tpu.memory_space<vmem>>, vector<16x32xf32>
    tpu.vector_store %arg4[%c0_5, %c0_6], %6 {strides = array<i32>} : memref<16x32xf32, #tpu.memory_space<vmem>>, vector<16x32xf32>,
    %8 = vector.extract_strided_slice %5 {offsets = [0, 32], sizes = [16, 32], strides = [1, 1]} : vector<16x96xf32> to vector<16x32xf32>
    %c0_7 = arith.constant 0 : index
    %c0_8 = arith.constant 0 : index
    %9 = vector.load %arg5[%c0_7, %c0_8] : memref<16x32xf32, #tpu.memory_space<vmem>>, vector<16x32xf32>
    tpu.vector_store %arg5[%c0_7, %c0_8], %8 {strides = array<i32>} : memref<16x32xf32, #tpu.memory_space<vmem>>, vector<16x32xf32>,
    %10 = vector.extract_strided_slice %5 {offsets = [0, 64], sizes = [16, 32], strides = [1, 1]} : vector<16x96xf32> to vector<16x32xf32>
    %c0_9 = arith.constant 0 : index
    %c0_10 = arith.constant 0 : index
    %11 = vector.load %arg6[%c0_9, %c0_10] : memref<16x32xf32, #tpu.memory_space<vmem>>, vector<16x32xf32>
    tpu.vector_store %arg6[%c0_9, %c0_10], %10 {strides = array<i32>} : memref<16x32xf32, #tpu.memory_space<vmem>>, vector<16x32xf32>,
    return
  }
  func.func @transform_0(%arg0: i32) -> (i32, i32) {
    %c0_i32 = arith.constant 0 : i32
    %c0_i32_0 = arith.constant 0 : i32
    return %arg0, %c0_i32 : i32, i32
  }
  func.func @transform_1(%arg0: i32) -> (i32, i32) {
    %c0_i32 = arith.constant 0 : i32
    %c0_i32_0 = arith.constant 0 : i32
    %c0_i32_1 = arith.constant 0 : i32
    return %c0_i32, %c0_i32_0 : i32, i32
  }
  func.func @transform_2(%arg0: i32) -> (i32, i32) {
    %c0_i32 = arith.constant 0 : i32
    %c0_i32_0 = arith.constant 0 : i32
    %c0_i32_1 = arith.constant 0 : i32
    return %c0_i32, %c0_i32_0 : i32, i32
  }
  func.func @transform_3(%arg0: i32) -> (i32, i32) {
    %c0_i32 = arith.constant 0 : i32
    %c0_i32_0 = arith.constant 0 : i32
    return %arg0, %c0_i32 : i32, i32
  }
  func.func @transform_4(%arg0: i32) -> (i32, i32) {
    %c0_i32 = arith.constant 0 : i32
    %c0_i32_0 = arith.constant 0 : i32
    return %arg0, %c0_i32 : i32, i32
  }
  func.func @transform_5(%arg0: i32) -> (i32, i32) {
    %c0_i32 = arith.constant 0 : i32
    %c0_i32_0 = arith.constant 0 : i32
    return %arg0, %c0_i32 : i32, i32
  }
}

module attributes {stable_mosaic.version = 11 : i64} {
  func.func @kernel(%arg0: i32, %arg1: memref<2xi32, #tpu.memory_space<smem>>, %arg2: memref<1x16x32xf32, #tpu.memory_space<vmem>>, %arg3: memref<1x16x32xf32, #tpu.memory_space<vmem>>, %arg4: memref<1x1x2xf32, #tpu.memory_space<vmem>>, %arg5: memref<32x32xf32, #tpu.memory_space<vmem>>, %arg6: memref<1x32xf32, #tpu.memory_space<vmem>>, %arg7: memref<16x16xf32, #tpu.memory_space<vmem>>, %arg8: memref<1x16x32xf32, #tpu.memory_space<vmem>>, %arg9: memref<32x32xf32, #tpu.memory_space<vmem>>) attributes {dimension_semantics = [#tpu.dimension_semantics<parallel>], iteration_bounds = array<i64: 2>, scalar_prefetch = 1 : i64, scratch_operands = 1 : i64, tpu.core_type = #tpu.core_type<tc>, window_params = [{transform_indices = @transform_0, window_bounds = array<i64: 1, 16, 32>}, {transform_indices = @transform_1, window_bounds = array<i64: 1, 16, 32>}, {transform_indices = @transform_2, window_bounds = array<i64: 1, 1, 2>}, {pipeline_mode = #tpu.pipeline_mode<synchronous>, transform_indices = @transform_3, window_bounds = array<i64: 32, 32>}, {pipeline_mode = #tpu.pipeline_mode<synchronous>, transform_indices = @transform_4, window_bounds = array<i64: 1, 32>}, {pipeline_mode = #tpu.pipeline_mode<synchronous>, transform_indices = @transform_5, window_bounds = array<i64: 16, 16>}, {transform_indices = @transform_6, window_bounds = array<i64: 1, 16, 32>}]} {
    %c0 = arith.constant 0 : index
    %c0_0 = arith.constant 0 : index
    %c0_1 = arith.constant 0 : index
    %0 = vector.load %arg3[%c0, %c0_0, %c0_1] : memref<1x16x32xf32, #tpu.memory_space<vmem>>, vector<1x16x32xf32>
    %1 = vector.shape_cast %0 : vector<1x16x32xf32> to vector<16x32xf32>
    %c0_2 = arith.constant 0 : index
    %c0_3 = arith.constant 0 : index
    %2 = vector.load %arg9[%c0_2, %c0_3] : memref<32x32xf32, #tpu.memory_space<vmem>>, vector<16x32xf32>
    tpu.vector_store %arg9[%c0_2, %c0_3], %1 {strides = array<i32>} : memref<32x32xf32, #tpu.memory_space<vmem>>, vector<16x32xf32>,
    %c16 = arith.constant 16 : index
    %c0_4 = arith.constant 0 : index
    %3 = vector.load %arg9[%c16, %c0_4] : memref<32x32xf32, #tpu.memory_space<vmem>>, vector<16x32xf32>
    tpu.vector_store %arg9[%c16, %c0_4], %1 {strides = array<i32>} : memref<32x32xf32, #tpu.memory_space<vmem>>, vector<16x32xf32>,
    %c0_5 = arith.constant 0 : index
    %c0_6 = arith.constant 0 : index
    %c0_7 = arith.constant 0 : index
    %4 = vector.load %arg4[%c0_5, %c0_6, %c0_7] : memref<1x1x2xf32, #tpu.memory_space<vmem>>, vector<1x1x2xf32>
    %5 = vector.shape_cast %4 : vector<1x1x2xf32> to vector<1x2xf32>
    %cst = arith.constant 0.000000e+00 : f32
    %6 = vector.broadcast %cst : f32 to vector<16x32xf32>
    %c0_8 = arith.constant 0 : index
    %7 = memref.load %arg1[%c0_8] : memref<2xi32, #tpu.memory_space<smem>>
    %8 = vector.extract_strided_slice %5 {offsets = [0, 0], sizes = [1, 1], strides = [1, 1]} : vector<1x2xf32> to vector<1x1xf32>
    %9 = arith.index_cast %7 : i32 to index
    %c0_9 = arith.constant 0 : index
    %10 = vector.load %arg9[%9, %c0_9] : memref<32x32xf32, #tpu.memory_space<vmem>>, vector<16x32xf32>
    %11 = vector.broadcast %8 : vector<1x1xf32> to vector<16x32xf32>
    %12 = arith.mulf %11, %10 : vector<16x32xf32>
    %13 = arith.addf %6, %12 : vector<16x32xf32>
    %c1 = arith.constant 1 : index
    %14 = memref.load %arg1[%c1] : memref<2xi32, #tpu.memory_space<smem>>
    %15 = vector.extract_strided_slice %5 {offsets = [0, 1], sizes = [1, 1], strides = [1, 1]} : vector<1x2xf32> to vector<1x1xf32>
    %16 = arith.index_cast %14 : i32 to index
    %c0_10 = arith.constant 0 : index
    %17 = vector.load %arg9[%16, %c0_10] : memref<32x32xf32, #tpu.memory_space<vmem>>, vector<16x32xf32>
    %18 = vector.broadcast %15 : vector<1x1xf32> to vector<16x32xf32>
    %19 = arith.mulf %18, %17 : vector<16x32xf32>
    %20 = arith.addf %13, %19 : vector<16x32xf32>
    %c0_11 = arith.constant 0 : index
    %c0_12 = arith.constant 0 : index
    %21 = vector.load %arg5[%c0_11, %c0_12] : memref<32x32xf32, #tpu.memory_space<vmem>>, vector<32x32xf32>
    %cst_13 = arith.constant dense<0.000000e+00> : vector<16x32xf32>
    %22 = tpu.matmul %20, %21, %cst_13 {dimension_numbers = #tpu.dot_dimension_numbers<[1], [0], [0], [1], [0, 0, 1, 1], [], []>} : vector<16x32xf32>, vector<32x32xf32>, vector<16x32xf32> -> vector<16x32xf32>
    %c0_14 = arith.constant 0 : index
    %c0_15 = arith.constant 0 : index
    %23 = vector.load %arg6[%c0_14, %c0_15] : memref<1x32xf32, #tpu.memory_space<vmem>>, vector<1x32xf32>
    %24 = vector.broadcast %23 : vector<1x32xf32> to vector<16x32xf32>
    %25 = arith.addf %22, %24 : vector<16x32xf32>
    %c0_16 = arith.constant 0 : index
    %c0_17 = arith.constant 0 : index
    %c0_18 = arith.constant 0 : index
    %26 = vector.load %arg2[%c0_16, %c0_17, %c0_18] : memref<1x16x32xf32, #tpu.memory_space<vmem>>, vector<1x16x32xf32>
    %27 = vector.shape_cast %26 : vector<1x16x32xf32> to vector<16x32xf32>
    %28 = arith.addf %27, %25 : vector<16x32xf32>
    %c0_19 = arith.constant 0 : index
    %c0_20 = arith.constant 0 : index
    %29 = vector.load %arg7[%c0_19, %c0_20] : memref<16x16xf32, #tpu.memory_space<vmem>>, vector<16x16xf32>
    %cst_21 = arith.constant dense<0.000000e+00> : vector<16x32xf32>
    %30 = tpu.matmul %29, %28, %cst_21 {dimension_numbers = #tpu.dot_dimension_numbers<[1], [0], [0], [1], [0, 0, 1, 1], [], []>} : vector<16x16xf32>, vector<16x32xf32>, vector<16x32xf32> -> vector<16x32xf32>
    %31 = arith.subf %28, %30 : vector<16x32xf32>
    %c0_22 = arith.constant 0 : index
    %c0_23 = arith.constant 0 : index
    %c0_24 = arith.constant 0 : index
    %32 = vector.load %arg8[%c0_22, %c0_23, %c0_24] : memref<1x16x32xf32, #tpu.memory_space<vmem>>, vector<1x16x32xf32>
    %33 = vector.shape_cast %32 : vector<1x16x32xf32> to vector<16x32xf32>
    %34 = vector.shape_cast %31 : vector<16x32xf32> to vector<1x16x32xf32>
    tpu.vector_store %arg8[%c0_22, %c0_23, %c0_24], %34 {strides = array<i32>} : memref<1x16x32xf32, #tpu.memory_space<vmem>>, vector<1x16x32xf32>,
    return
  }
  func.func @transform_0(%arg0: i32, %arg1: memref<2xi32, #tpu.memory_space<smem>>) -> (i32, i32, i32) {
    %c0_i32 = arith.constant 0 : i32
    %c0_i32_0 = arith.constant 0 : i32
    %c0_i32_1 = arith.constant 0 : i32
    return %arg0, %c0_i32, %c0_i32_0 : i32, i32, i32
  }
  func.func @transform_1(%arg0: i32, %arg1: memref<2xi32, #tpu.memory_space<smem>>) -> (i32, i32, i32) {
    %c0_i32 = arith.constant 0 : i32
    %c0_i32_0 = arith.constant 0 : i32
    %c0_i32_1 = arith.constant 0 : i32
    return %arg0, %c0_i32, %c0_i32_0 : i32, i32, i32
  }
  func.func @transform_2(%arg0: i32, %arg1: memref<2xi32, #tpu.memory_space<smem>>) -> (i32, i32, i32) {
    %c0_i32 = arith.constant 0 : i32
    %c0_i32_0 = arith.constant 0 : i32
    %c0_i32_1 = arith.constant 0 : i32
    return %arg0, %c0_i32, %c0_i32_0 : i32, i32, i32
  }
  func.func @transform_3(%arg0: i32, %arg1: memref<2xi32, #tpu.memory_space<smem>>) -> (i32, i32) {
    %c0_i32 = arith.constant 0 : i32
    %c0_i32_0 = arith.constant 0 : i32
    %c0_i32_1 = arith.constant 0 : i32
    return %c0_i32, %c0_i32_0 : i32, i32
  }
  func.func @transform_4(%arg0: i32, %arg1: memref<2xi32, #tpu.memory_space<smem>>) -> (i32, i32) {
    %c0_i32 = arith.constant 0 : i32
    %c0_i32_0 = arith.constant 0 : i32
    %c0_i32_1 = arith.constant 0 : i32
    return %c0_i32, %c0_i32_0 : i32, i32
  }
  func.func @transform_5(%arg0: i32, %arg1: memref<2xi32, #tpu.memory_space<smem>>) -> (i32, i32) {
    %c0_i32 = arith.constant 0 : i32
    %c0_i32_0 = arith.constant 0 : i32
    %c0_i32_1 = arith.constant 0 : i32
    return %c0_i32, %c0_i32_0 : i32, i32
  }
  func.func @transform_6(%arg0: i32, %arg1: memref<2xi32, #tpu.memory_space<smem>>) -> (i32, i32, i32) {
    %c0_i32 = arith.constant 0 : i32
    %c0_i32_0 = arith.constant 0 : i32
    %c0_i32_1 = arith.constant 0 : i32
    return %arg0, %c0_i32, %c0_i32_0 : i32, i32, i32
  }
}

module attributes {stable_mosaic.version = 11 : i64} {
  func.func @_ff_decomp_ln_kernel(%arg0: i32, %arg1: memref<1x16x32xf32, #tpu.memory_space<vmem>>, %arg2: memref<32x64xf32, #tpu.memory_space<vmem>>, %arg3: memref<1x64xf32, #tpu.memory_space<vmem>>, %arg4: memref<64x32xf32, #tpu.memory_space<vmem>>, %arg5: memref<1x32xf32, #tpu.memory_space<vmem>>, %arg6: memref<16x16xf32, #tpu.memory_space<vmem>>, %arg7: memref<1x32xf32, #tpu.memory_space<vmem>>, %arg8: memref<1x32xf32, #tpu.memory_space<vmem>>, %arg9: memref<1x16x32xf32, #tpu.memory_space<vmem>>) attributes {dimension_semantics = [#tpu.dimension_semantics<parallel>], iteration_bounds = array<i64: 2>, scalar_prefetch = 0 : i64, scratch_operands = 0 : i64, tpu.core_type = #tpu.core_type<tc>, window_params = [{transform_indices = @transform_0, window_bounds = array<i64: 1, 16, 32>}, {pipeline_mode = #tpu.pipeline_mode<synchronous>, transform_indices = @transform_1, window_bounds = array<i64: 32, 64>}, {pipeline_mode = #tpu.pipeline_mode<synchronous>, transform_indices = @transform_2, window_bounds = array<i64: 1, 64>}, {pipeline_mode = #tpu.pipeline_mode<synchronous>, transform_indices = @transform_3, window_bounds = array<i64: 64, 32>}, {pipeline_mode = #tpu.pipeline_mode<synchronous>, transform_indices = @transform_4, window_bounds = array<i64: 1, 32>}, {pipeline_mode = #tpu.pipeline_mode<synchronous>, transform_indices = @transform_5, window_bounds = array<i64: 16, 16>}, {pipeline_mode = #tpu.pipeline_mode<synchronous>, transform_indices = @transform_6, window_bounds = array<i64: 1, 32>}, {pipeline_mode = #tpu.pipeline_mode<synchronous>, transform_indices = @transform_7, window_bounds = array<i64: 1, 32>}, {transform_indices = @transform_8, window_bounds = array<i64: 1, 16, 32>}]} {
    %c0 = arith.constant 0 : index
    %c0_0 = arith.constant 0 : index
    %c0_1 = arith.constant 0 : index
    %0 = vector.load %arg1[%c0, %c0_0, %c0_1] : memref<1x16x32xf32, #tpu.memory_space<vmem>>, vector<1x16x32xf32>
    %1 = vector.shape_cast %0 : vector<1x16x32xf32> to vector<16x32xf32>
    %c0_2 = arith.constant 0 : index
    %c0_3 = arith.constant 0 : index
    %2 = vector.load %arg2[%c0_2, %c0_3] : memref<32x64xf32, #tpu.memory_space<vmem>>, vector<32x64xf32>
    %cst = arith.constant dense<0.000000e+00> : vector<16x64xf32>
    %3 = tpu.matmul %1, %2, %cst {dimension_numbers = #tpu.dot_dimension_numbers<[1], [0], [0], [1], [0, 0, 1, 1], [], []>} : vector<16x32xf32>, vector<32x64xf32>, vector<16x64xf32> -> vector<16x64xf32>
    %c0_4 = arith.constant 0 : index
    %c0_5 = arith.constant 0 : index
    %4 = vector.load %arg3[%c0_4, %c0_5] : memref<1x64xf32, #tpu.memory_space<vmem>>, vector<1x64xf32>
    %5 = vector.broadcast %4 : vector<1x64xf32> to vector<16x64xf32>
    %6 = arith.addf %3, %5 : vector<16x64xf32>
    %cst_6 = arith.constant 5.000000e-01 : f32
    %7 = vector.broadcast %cst_6 : f32 to vector<16x64xf32>
    %8 = arith.mulf %7, %6 : vector<16x64xf32>
    %cst_7 = arith.constant 0.707106769 : f32
    %9 = vector.broadcast %cst_7 : f32 to vector<16x64xf32>
    %10 = arith.mulf %6, %9 : vector<16x64xf32>
    %cst_8 = arith.constant 0.000000e+00 : f32
    %11 = vector.broadcast %cst_8 : f32 to vector<16x64xf32>
    %12 = arith.cmpf oge, %10, %11 : vector<16x64xf32>
    %cst_9 = arith.constant 1.000000e+00 : f32
    %cst_10 = arith.constant -1.000000e+00 : f32
    %13 = vector.broadcast %cst_9 : f32 to vector<16x64xf32>
    %14 = vector.broadcast %cst_10 : f32 to vector<16x64xf32>
    %15 = arith.select %12, %13, %14 : vector<16x64xi1>, vector<16x64xf32>
    %16 = math.absf %10 : vector<16x64xf32>
    %cst_11 = arith.constant 0.327591091 : f32
    %17 = vector.broadcast %cst_11 : f32 to vector<16x64xf32>
    %18 = arith.mulf %17, %16 : vector<16x64xf32>
    %cst_12 = arith.constant 1.000000e+00 : f32
    %19 = vector.broadcast %cst_12 : f32 to vector<16x64xf32>
    %20 = arith.addf %19, %18 : vector<16x64xf32>
    %cst_13 = arith.constant 1.000000e+00 : f32
    %21 = vector.broadcast %cst_13 : f32 to vector<16x64xf32>
    %22 = arith.divf %21, %20 : vector<16x64xf32>
    %cst_14 = arith.constant 1.06140542 : f32
    %23 = vector.broadcast %cst_14 : f32 to vector<16x64xf32>
    %24 = arith.mulf %23, %22 : vector<16x64xf32>
    %cst_15 = arith.constant -1.45315206 : f32
    %25 = vector.broadcast %cst_15 : f32 to vector<16x64xf32>
    %26 = arith.addf %24, %25 : vector<16x64xf32>
    %27 = arith.mulf %26, %22 : vector<16x64xf32>
    %cst_16 = arith.constant 1.42141378 : f32
    %28 = vector.broadcast %cst_16 : f32 to vector<16x64xf32>
    %29 = arith.addf %27, %28 : vector<16x64xf32>
    %30 = arith.mulf %29, %22 : vector<16x64xf32>
    %cst_17 = arith.constant -0.284496725 : f32
    %31 = vector.broadcast %cst_17 : f32 to vector<16x64xf32>
    %32 = arith.addf %30, %31 : vector<16x64xf32>
    %33 = arith.mulf %32, %22 : vector<16x64xf32>
    %cst_18 = arith.constant 0.254829586 : f32
    %34 = vector.broadcast %cst_18 : f32 to vector<16x64xf32>
    %35 = arith.addf %33, %34 : vector<16x64xf32>
    %36 = arith.mulf %35, %22 : vector<16x64xf32>
    %cst_19 = arith.constant 0.000000e+00 : f32
    %37 = vector.broadcast %cst_19 : f32 to vector<16x64xf32>
    %38 = arith.subf %37, %16 : vector<16x64xf32>
    %39 = arith.mulf %38, %16 : vector<16x64xf32>
    %40 = math.exp %39 : vector<16x64xf32>
    %41 = arith.mulf %36, %40 : vector<16x64xf32>
    %cst_20 = arith.constant 1.000000e+00 : f32
    %42 = vector.broadcast %cst_20 : f32 to vector<16x64xf32>
    %43 = arith.subf %42, %41 : vector<16x64xf32>
    %44 = arith.mulf %15, %43 : vector<16x64xf32>
    %cst_21 = arith.constant 1.000000e+00 : f32
    %45 = vector.broadcast %cst_21 : f32 to vector<16x64xf32>
    %46 = arith.addf %45, %44 : vector<16x64xf32>
    %47 = arith.mulf %8, %46 : vector<16x64xf32>
    %c0_22 = arith.constant 0 : index
    %c0_23 = arith.constant 0 : index
    %48 = vector.load %arg4[%c0_22, %c0_23] : memref<64x32xf32, #tpu.memory_space<vmem>>, vector<64x32xf32>
    %cst_24 = arith.constant dense<0.000000e+00> : vector<16x32xf32>
    %49 = tpu.matmul %47, %48, %cst_24 {dimension_numbers = #tpu.dot_dimension_numbers<[1], [0], [0], [1], [0, 0, 1, 1], [], []>} : vector<16x64xf32>, vector<64x32xf32>, vector<16x32xf32> -> vector<16x32xf32>
    %c0_25 = arith.constant 0 : index
    %c0_26 = arith.constant 0 : index
    %50 = vector.load %arg5[%c0_25, %c0_26] : memref<1x32xf32, #tpu.memory_space<vmem>>, vector<1x32xf32>
    %51 = vector.broadcast %50 : vector<1x32xf32> to vector<16x32xf32>
    %52 = arith.addf %49, %51 : vector<16x32xf32>
    %53 = arith.addf %1, %52 : vector<16x32xf32>
    %c0_27 = arith.constant 0 : index
    %c0_28 = arith.constant 0 : index
    %54 = vector.load %arg6[%c0_27, %c0_28] : memref<16x16xf32, #tpu.memory_space<vmem>>, vector<16x16xf32>
    %cst_29 = arith.constant dense<0.000000e+00> : vector<16x32xf32>
    %55 = tpu.matmul %54, %53, %cst_29 {dimension_numbers = #tpu.dot_dimension_numbers<[1], [0], [0], [1], [0, 0, 1, 1], [], []>} : vector<16x16xf32>, vector<16x32xf32>, vector<16x32xf32> -> vector<16x32xf32>
    %56 = arith.subf %53, %55 : vector<16x32xf32>
    %cst_30 = arith.constant dense<0.000000e+00> : vector<16xf32>
    %57 = vector.multi_reduction <add>, %56, %cst_30 [1] : vector<16x32xf32> to vector<16xf32>
    %58 = vector.shape_cast %57 : vector<16xf32> to vector<16x1xf32>
    %cst_31 = arith.constant 3.200000e+01 : f32
    %59 = vector.broadcast %cst_31 : f32 to vector<16x1xf32>
    %60 = arith.divf %58, %59 : vector<16x1xf32>
    %61 = vector.broadcast %60 : vector<16x1xf32> to vector<16x32xf32>
    %62 = arith.subf %56, %61 : vector<16x32xf32>
    %63 = vector.broadcast %60 : vector<16x1xf32> to vector<16x32xf32>
    %64 = arith.subf %56, %63 : vector<16x32xf32>
    %65 = arith.mulf %62, %64 : vector<16x32xf32>
    %cst_32 = arith.constant dense<0.000000e+00> : vector<16xf32>
    %66 = vector.multi_reduction <add>, %65, %cst_32 [1] : vector<16x32xf32> to vector<16xf32>
    %67 = vector.shape_cast %66 : vector<16xf32> to vector<16x1xf32>
    %cst_33 = arith.constant 3.200000e+01 : f32
    %68 = vector.broadcast %cst_33 : f32 to vector<16x1xf32>
    %69 = arith.divf %67, %68 : vector<16x1xf32>
    %70 = vector.broadcast %60 : vector<16x1xf32> to vector<16x32xf32>
    %71 = arith.subf %56, %70 : vector<16x32xf32>
    %cst_34 = arith.constant 9.99999974E-6 : f32
    %72 = vector.broadcast %cst_34 : f32 to vector<16x1xf32>
    %73 = arith.addf %69, %72 : vector<16x1xf32>
    %74 = math.rsqrt %73 : vector<16x1xf32>
    %75 = vector.broadcast %74 : vector<16x1xf32> to vector<16x32xf32>
    %76 = arith.mulf %71, %75 : vector<16x32xf32>
    %c0_35 = arith.constant 0 : index
    %c0_36 = arith.constant 0 : index
    %77 = vector.load %arg7[%c0_35, %c0_36] : memref<1x32xf32, #tpu.memory_space<vmem>>, vector<1x32xf32>
    %78 = vector.broadcast %77 : vector<1x32xf32> to vector<16x32xf32>
    %79 = arith.mulf %76, %78 : vector<16x32xf32>
    %c0_37 = arith.constant 0 : index
    %c0_38 = arith.constant 0 : index
    %80 = vector.load %arg8[%c0_37, %c0_38] : memref<1x32xf32, #tpu.memory_space<vmem>>, vector<1x32xf32>
    %81 = vector.broadcast %80 : vector<1x32xf32> to vector<16x32xf32>
    %82 = arith.addf %79, %81 : vector<16x32xf32>
    %cst_39 = arith.constant dense<0.000000e+00> : vector<32xf32>
    %83 = vector.multi_reduction <add>, %82, %cst_39 [0] : vector<16x32xf32> to vector<32xf32>
    %84 = vector.shape_cast %83 : vector<32xf32> to vector<1x32xf32>
    %cst_40 = arith.constant 1.600000e+01 : f32
    %85 = vector.broadcast %cst_40 : f32 to vector<1x32xf32>
    %86 = arith.divf %84, %85 : vector<1x32xf32>
    %87 = vector.broadcast %86 : vector<1x32xf32> to vector<16x32xf32>
    %88 = arith.subf %82, %87 : vector<16x32xf32>
    %c0_41 = arith.constant 0 : index
    %c0_42 = arith.constant 0 : index
    %c0_43 = arith.constant 0 : index
    %89 = vector.load %arg9[%c0_41, %c0_42, %c0_43] : memref<1x16x32xf32, #tpu.memory_space<vmem>>, vector<1x16x32xf32>
    %90 = vector.shape_cast %89 : vector<1x16x32xf32> to vector<16x32xf32>
    %91 = vector.shape_cast %88 : vector<16x32xf32> to vector<1x16x32xf32>
    tpu.vector_store %arg9[%c0_41, %c0_42, %c0_43], %91 {strides = array<i32>} : memref<1x16x32xf32, #tpu.memory_space<vmem>>, vector<1x16x32xf32>,
    return
  }
  func.func @transform_0(%arg0: i32) -> (i32, i32, i32) {
    %c0_i32 = arith.constant 0 : i32
    %c0_i32_0 = arith.constant 0 : i32
    %c0_i32_1 = arith.constant 0 : i32
    return %arg0, %c0_i32, %c0_i32_0 : i32, i32, i32
  }
  func.func @transform_1(%arg0: i32) -> (i32, i32) {
    %c0_i32 = arith.constant 0 : i32
    %c0_i32_0 = arith.constant 0 : i32
    %c0_i32_1 = arith.constant 0 : i32
    return %c0_i32, %c0_i32_0 : i32, i32
  }
  func.func @transform_2(%arg0: i32) -> (i32, i32) {
    %c0_i32 = arith.constant 0 : i32
    %c0_i32_0 = arith.constant 0 : i32
    %c0_i32_1 = arith.constant 0 : i32
    return %c0_i32, %c0_i32_0 : i32, i32
  }
  func.func @transform_3(%arg0: i32) -> (i32, i32) {
    %c0_i32 = arith.constant 0 : i32
    %c0_i32_0 = arith.constant 0 : i32
    %c0_i32_1 = arith.constant 0 : i32
    return %c0_i32, %c0_i32_0 : i32, i32
  }
  func.func @transform_4(%arg0: i32) -> (i32, i32) {
    %c0_i32 = arith.constant 0 : i32
    %c0_i32_0 = arith.constant 0 : i32
    %c0_i32_1 = arith.constant 0 : i32
    return %c0_i32, %c0_i32_0 : i32, i32
  }
  func.func @transform_5(%arg0: i32) -> (i32, i32) {
    %c0_i32 = arith.constant 0 : i32
    %c0_i32_0 = arith.constant 0 : i32
    %c0_i32_1 = arith.constant 0 : i32
    return %c0_i32, %c0_i32_0 : i32, i32
  }
  func.func @transform_6(%arg0: i32) -> (i32, i32) {
    %c0_i32 = arith.constant 0 : i32
    %c0_i32_0 = arith.constant 0 : i32
    %c0_i32_1 = arith.constant 0 : i32
    return %c0_i32, %c0_i32_0 : i32, i32
  }
  func.func @transform_7(%arg0: i32) -> (i32, i32) {
    %c0_i32 = arith.constant 0 : i32
    %c0_i32_0 = arith.constant 0 : i32
    %c0_i32_1 = arith.constant 0 : i32
    return %c0_i32, %c0_i32_0 : i32, i32
  }
  func.func @transform_8(%arg0: i32) -> (i32, i32, i32) {
    %c0_i32 = arith.constant 0 : i32
    %c0_i32_0 = arith.constant 0 : i32
    %c0_i32_1 = arith.constant 0 : i32
    return %arg0, %c0_i32, %c0_i32_0 : i32, i32, i32
  }
}

</mosaic_0001>

<llo_original>
// kernel: reverse.0
$region0: #{reverse.0}
  %s0 = inlined_call_operand.vmem [shape: f32[2,4,8,7], index: 0, kind: input, shape index: {}]
  %s1 = inlined_call_operand.vmem [shape: f32[2,4,8,7], index: 1, kind: output, shape index: {}]
  %v2 = vlaneseq
  %v3 = vsub.s32 6, %v2
  %4 = vset.pattern.permute.xlu0 %v3
  $region1: #{reverse.0} parent=0
    #allocation0 [shape = 'u8[32768]{0}', space=vmem, size = 0x8000, scoped, tag = 'operand span for operand 0']
    #allocation1 [shape = 'u8[32768]{0}', space=vmem, size = 0x8000, scoped, tag = 'operand span for operand 1']
    // Predicated region
    $region2: #{reverse.0} parent=1 // pred_check
      _
    $region3: #{reverse.0} parent=1 // pred_check_branch
      %6 = sbr.rel (0) target = $region5
    $region4: #{reverse.0} parent=1 // pred_region
      // Predicated region
      $region6: #{reverse.0} parent=4 // pred_check
        _
      $region7: #{reverse.0} parent=4 // pred_check_branch
        %8 = sbr.rel (0) target = $region9
      $region8: #{reverse.0} parent=4 // pred_region
        // Predicated region
        $region21: #{reverse.0} parent=8 // pred_check
          _
        $region22: #{reverse.0} parent=8 // pred_check_branch
          %37 = sbr.rel (0) target = $region24
        $region23: #{reverse.0} parent=8 // pred_region
          loop: start=0, step=1, limit=1
          $region25: #{reverse.0} parent=23 // loop_pre_header
            _
          $region26: #{reverse.0} parent=23 // loop_header
            %s39 = sphi 0, %s43
            %p40 = scmp.ge.s32.totalorder %s39, 1
            %s44 = sphi %s0, %s0
            %s45 = sphi [#allocation0], [#allocation0]
          $region27: #{reverse.0} parent=23 // loop_header_branch
            %42 = sbr.rel (%p40) target = $region31
          $region28: #{reverse.0} parent=23 // loop_body
            %v46 = vld [vmem:[%s44] sm:$0xff]
            %47 = vst [vmem:[%s45] sm:$0xff] %v46
            %v48 = vld [vmem:[%s44 + $0x8] sm:$0xff]
            %49 = vst [vmem:[%s45 + $0x8] sm:$0xff] %v48
            %v50 = vld [vmem:[%s44 + $0x10] sm:$0xff]
            %51 = vst [vmem:[%s45 + $0x10] sm:$0xff] %v50
            %v52 = vld [vmem:[%s44 + $0x18] sm:$0xff]
            %53 = vst [vmem:[%s45 + $0x18] sm:$0xff] %v52
            %v54 = vld [vmem:[%s44 + $0x20] sm:$0xff]
            %55 = vst [vmem:[%s45 + $0x20] sm:$0xff] %v54
            %v56 = vld [vmem:[%s44 + $0x28] sm:$0xff]
            %57 = vst [vmem:[%s45 + $0x28] sm:$0xff] %v56
            %v58 = vld [vmem:[%s44 + $0x30] sm:$0xff]
            %59 = vst [vmem:[%s45 + $0x30] sm:$0xff] %v58
            %v60 = vld [vmem:[%s44 + $0x38] sm:$0xff]
            %61 = vst [vmem:[%s45 + $0x38] sm:$0xff] %v60
          $region29: #{reverse.0} parent=23 // loop_footer
            %s43 = sadd.s32 1, %s39
          $region30: #{reverse.0} parent=23 // loop_footer_branch
            %38 = sbr.rel target = $region26
          $region31: #{reverse.0} parent=23 // loop_exit
            _
        $region24: #{reverse.0} parent=8 // pred_fallthru
          _
        // Predicated region
        $region32: #{reverse.0} parent=8 // pred_check
          _
        $region33: #{reverse.0} parent=8 // pred_check_branch
          %63 = sbr.rel target = $region35
        $region34: #{reverse.0} parent=8 // pred_region
          _
        $region35: #{reverse.0} parent=8 // pred_fallthru
          _
      $region9: #{reverse.0} parent=4 // pred_fallthru
        _
      // Predicated region
      $region10: #{reverse.0} parent=4 // pred_check
        _
      $region11: #{reverse.0} parent=4 // pred_check_branch
        %10 = sbr.rel target = $region13
      $region12: #{reverse.0} parent=4 // pred_region
        loop: start=0, step=1, limit=1
        $region14: #{reverse.0} parent=12 // loop_pre_header
          _
        $region15: #{reverse.0} parent=12 // loop_header
          %s13 = sphi 0, %s17
          %p14 = scmp.ge.s32.totalorder %s13, 1
          %s18 = sphi %s0, %s0
          %s19 = sphi [#allocation0], [#allocation0]
        $region16: #{reverse.0} parent=12 // loop_header_branch
          %16 = sbr.rel (%p14) target = $region20
        $region17: #{reverse.0} parent=12 // loop_body
          %v20 = vld [vmem:[%s18] sm:$0xff]
          %21 = vst [vmem:[%s19] sm:$0xff] %v20
          %v22 = vld [vmem:[%s18 + $0x8] sm:$0xff]
          %23 = vst [vmem:[%s19 + $0x8] sm:$0xff] %v22
          %v24 = vld [vmem:[%s18 + $0x10] sm:$0xff]
          %25 = vst [vmem:[%s19 + $0x10] sm:$0xff] %v24
          %v26 = vld [vmem:[%s18 + $0x18] sm:$0xff]
          %27 = vst [vmem:[%s19 + $0x18] sm:$0xff] %v26
          %v28 = vld [vmem:[%s18 + $0x20] sm:$0xff]
          %29 = vst [vmem:[%s19 + $0x20] sm:$0xff] %v28
          %v30 = vld [vmem:[%s18 + $0x28] sm:$0xff]
          %31 = vst [vmem:[%s19 + $0x28] sm:$0xff] %v30
          %v32 = vld [vmem:[%s18 + $0x30] sm:$0xff]
          %33 = vst [vmem:[%s19 + $0x30] sm:$0xff] %v32
          %v34 = vld [vmem:[%s18 + $0x38] sm:$0xff]
          %35 = vst [vmem:[%s19 + $0x38] sm:$0xff] %v34
        $region18: #{reverse.0} parent=12 // loop_footer
          %s17 = sadd.s32 1, %s13
        $region19: #{reverse.0} parent=12 // loop_footer_branch
          %12 = sbr.rel target = $region15
        $region20: #{reverse.0} parent=12 // loop_exit
          _
      $region13: #{reverse.0} parent=4 // pred_fallthru
        _
    $region5: #{reverse.0} parent=1 // pred_fallthru
      _
    %64 = vnop
    %v65 = vld [vmem:[#allocation0] sm:$0xff]
    %66 = vperm.xlu0 %4, %v65
    %v67 = vpop.permute.xlu0 %66
    %68 = vst [vmem:[#allocation1] sm:$0xff] %v67
    %s69 = scalar_lea.vmem [#allocation1], 8
    %s70 = scalar_lea.vmem [#allocation0], 8
    %v71 = vld [vmem:[%s70] sm:$0xff]
    %72 = vperm.xlu0 %4, %v71
    %v73 = vpop.permute.xlu0 %72
    %74 = vst [vmem:[%s69] sm:$0xff] %v73
    %s75 = scalar_lea.vmem [#allocation1], 16
    %s76 = scalar_lea.vmem [#allocation0], 16
    %v77 = vld [vmem:[%s76] sm:$0xff]
    %78 = vperm.xlu0 %4, %v77
    %v79 = vpop.permute.xlu0 %78
    %80 = vst [vmem:[%s75] sm:$0xff] %v79
    %s81 = scalar_lea.vmem [#allocation1], 24
    %s82 = scalar_lea.vmem [#allocation0], 24
    %v83 = vld [vmem:[%s82] sm:$0xff]
    %84 = vperm.xlu0 %4, %v83
    %v85 = vpop.permute.xlu0 %84
    %86 = vst [vmem:[%s81] sm:$0xff] %v85
    %s87 = scalar_lea.vmem [#allocation1], 32
    %s88 = scalar_lea.vmem [#allocation0], 32
    %v89 = vld [vmem:[%s88] sm:$0xff]
    %90 = vperm.xlu0 %4, %v89
    %v91 = vpop.permute.xlu0 %90
    %92 = vst [vmem:[%s87] sm:$0xff] %v91
    %s93 = scalar_lea.vmem [#allocation1], 40
    %s94 = scalar_lea.vmem [#allocation0], 40
    %v95 = vld [vmem:[%s94] sm:$0xff]
    %96 = vperm.xlu0 %4, %v95
    %v97 = vpop.permute.xlu0 %96
    %98 = vst [vmem:[%s93] sm:$0xff] %v97
    %s99 = scalar_lea.vmem [#allocation1], 48
    %s100 = scalar_lea.vmem [#allocation0], 48
    %v101 = vld [vmem:[%s100] sm:$0xff]
    %102 = vperm.xlu0 %4, %v101
    %v103 = vpop.permute.xlu0 %102
    %104 = vst [vmem:[%s99] sm:$0xff] %v103
    %s105 = scalar_lea.vmem [#allocation1], 56
    %s106 = scalar_lea.vmem [#allocation0], 56
    %v107 = vld [vmem:[%s106] sm:$0xff]
    %108 = vperm.xlu0 %4, %v107
    %v109 = vpop.permute.xlu0 %108
    %110 = vst [vmem:[%s105] sm:$0xff] %v109
    // Predicated region
    $region36: #{reverse.0} parent=1 // pred_check
      _
    $region37: #{reverse.0} parent=1 // pred_check_branch
      %112 = sbr.rel (0) target = $region39
    $region38: #{reverse.0} parent=1 // pred_region
      // Predicated region
      $region40: #{reverse.0} parent=38 // pred_check
        _
      $region41: #{reverse.0} parent=38 // pred_check_branch
        %114 = sbr.rel (0) target = $region43
      $region42: #{reverse.0} parent=38 // pred_region
        // Predicated region
        $region55: #{reverse.0} parent=42 // pred_check
          _
        $region56: #{reverse.0} parent=42 // pred_check_branch
          %143 = sbr.rel (0) target = $region58
        $region57: #{reverse.0} parent=42 // pred_region
          loop: start=0, step=1, limit=1
          $region59: #{reverse.0} parent=57 // loop_pre_header
            _
          $region60: #{reverse.0} parent=57 // loop_header
            %s145 = sphi 0, %s149
            %p146 = scmp.ge.s32.totalorder %s145, 1
            %s150 = sphi [#allocation1], [#allocation1]
            %s151 = sphi %s1, %s1
          $region61: #{reverse.0} parent=57 // loop_header_branch
            %148 = sbr.rel (%p146) target = $region65
          $region62: #{reverse.0} parent=57 // loop_body
            %v152 = vld [vmem:[%s150] sm:$0xff]
            %153 = vst [vmem:[%s151] sm:$0xff] %v152
            %v154 = vld [vmem:[%s150 + $0x8] sm:$0xff]
            %155 = vst [vmem:[%s151 + $0x8] sm:$0xff] %v154
            %v156 = vld [vmem:[%s150 + $0x10] sm:$0xff]
            %157 = vst [vmem:[%s151 + $0x10] sm:$0xff] %v156
            %v158 = vld [vmem:[%s150 + $0x18] sm:$0xff]
            %159 = vst [vmem:[%s151 + $0x18] sm:$0xff] %v158
            %v160 = vld [vmem:[%s150 + $0x20] sm:$0xff]
            %161 = vst [vmem:[%s151 + $0x20] sm:$0xff] %v160
            %v162 = vld [vmem:[%s150 + $0x28] sm:$0xff]
            %163 = vst [vmem:[%s151 + $0x28] sm:$0xff] %v162
            %v164 = vld [vmem:[%s150 + $0x30] sm:$0xff]
            %165 = vst [vmem:[%s151 + $0x30] sm:$0xff] %v164
            %v166 = vld [vmem:[%s150 + $0x38] sm:$0xff]
            %167 = vst [vmem:[%s151 + $0x38] sm:$0xff] %v166
          $region63: #{reverse.0} parent=57 // loop_footer
            %s149 = sadd.s32 1, %s145
          $region64: #{reverse.0} parent=57 // loop_footer_branch
            %144 = sbr.rel target = $region60
          $region65: #{reverse.0} parent=57 // loop_exit
            _
        $region58: #{reverse.0} parent=42 // pred_fallthru
          _
        // Predicated region
        $region66: #{reverse.0} parent=42 // pred_check
          _
        $region67: #{reverse.0} parent=42 // pred_check_branch
          %169 = sbr.rel target = $region69
        $region68: #{reverse.0} parent=42 // pred_region
          _
        $region69: #{reverse.0} parent=42 // pred_fallthru
          _
      $region43: #{reverse.0} parent=38 // pred_fallthru
        _
      // Predicated region
      $region44: #{reverse.0} parent=38 // pred_check
        _
      $region45: #{reverse.0} parent=38 // pred_check_branch
        %116 = sbr.rel target = $region47
      $region46: #{reverse.0} parent=38 // pred_region
        loop: start=0, step=1, limit=1
        $region48: #{reverse.0} parent=46 // loop_pre_header
          _
        $region49: #{reverse.0} parent=46 // loop_header
          %s119 = sphi 0, %s123
          %p120 = scmp.ge.s32.totalorder %s119, 1
          %s124 = sphi [#allocation1], [#allocation1]
          %s125 = sphi %s1, %s1
        $region50: #{reverse.0} parent=46 // loop_header_branch
          %122 = sbr.rel (%p120) target = $region54
        $region51: #{reverse.0} parent=46 // loop_body
          %v126 = vld [vmem:[%s124] sm:$0xff]
          %127 = vst [vmem:[%s125] sm:$0xff] %v126
          %v128 = vld [vmem:[%s124 + $0x8] sm:$0xff]
          %129 = vst [vmem:[%s125 + $0x8] sm:$0xff] %v128
          %v130 = vld [vmem:[%s124 + $0x10] sm:$0xff]
          %131 = vst [vmem:[%s125 + $0x10] sm:$0xff] %v130
          %v132 = vld [vmem:[%s124 + $0x18] sm:$0xff]
          %133 = vst [vmem:[%s125 + $0x18] sm:$0xff] %v132
          %v134 = vld [vmem:[%s124 + $0x20] sm:$0xff]
          %135 = vst [vmem:[%s125 + $0x20] sm:$0xff] %v134
          %v136 = vld [vmem:[%s124 + $0x28] sm:$0xff]
          %137 = vst [vmem:[%s125 + $0x28] sm:$0xff] %v136
          %v138 = vld [vmem:[%s124 + $0x30] sm:$0xff]
          %139 = vst [vmem:[%s125 + $0x30] sm:$0xff] %v138
          %v140 = vld [vmem:[%s124 + $0x38] sm:$0xff]
          %141 = vst [vmem:[%s125 + $0x38] sm:$0xff] %v140
        $region52: #{reverse.0} parent=46 // loop_footer
          %s123 = sadd.s32 1, %s119
        $region53: #{reverse.0} parent=46 // loop_footer_branch
          %118 = sbr.rel target = $region49
        $region54: #{reverse.0} parent=46 // loop_exit
          _
      $region47: #{reverse.0} parent=38 // pred_fallthru
        _
    $region39: #{reverse.0} parent=1 // pred_fallthru
      _
    %170 = vnop

// kernel: _lambda_.3
$region0: #{_lambda_.3}
  #allocation0 [shape = 'u32[]', space=smem, size = 0x4, offset = 0x4, fixed_abs, tag = 'smem constant byte address 0x4 - core index']
  #allocation1 [shape = 'u32[144,128]{1,0:T(1,128)}', space=vmem, size = 0x12000, scoped, tag = 'internal scratch']
  %s0 = inlined_call_operand.hbm [shape: f32[32,32], index: 0, kind: input, shape index: {}]
  %s1 = inlined_call_operand.vmem [shape: f32[32,96], index: 1, kind: input, shape index: {}]
  %s2 = inlined_call_operand.vmem [shape: f32[1,96], index: 2, kind: input, shape index: {}]
  %s3 = inlined_call_operand.vmem [shape: f32[32,32], index: 3, kind: output, shape index: {0}]
  %s4 = inlined_call_operand.vmem [shape: f32[32,32], index: 4, kind: output, shape index: {1}]
  %s5 = inlined_call_operand.vmem [shape: f32[32,32], index: 5, kind: output, shape index: {2}]
  %6 = xla_tuple %s3, %s4, %s5
  %s7 = sld [smem:[#allocation0]]
  $region65: #{_lambda_.3} parent=0
    _
  %s9 = ssub.s32 1, %s7
  %s10 = scalar_select 0, %s9, %s7
  $region1: #{_lambda_.3} parent=0
    #allocation2 [shape = 'u8[16384]{0}', space=vmem, size = 0x4000, scoped, tag = 'input window, operand 0']
    #allocation3 [shape = 's32[2]{0}', space=sflag, size = 0x8, scoped, tag = 'scoped memory for _lambda_.3']
    %11 = vsyncpa [#allocation3], 0
    %s12 = scalar_lea.sflag [#allocation3], 1
    %13 = vsyncpa %s12, 0
    loop: start=0, step=1, limit=4
    $region2: #{_lambda_.3} parent=1 // loop_pre_header
      _
    $region3: #{_lambda_.3} parent=1 // loop_header
      %s15 = sphi 0, %s19
      %p16 = scmp.ge.s32.totalorder %s15, 4
      %s25 = sphi 0, %s27
      %s28 = sphi 0, %s25
      %s29 = sphi 0, %s28
      %s45 = sphi 0, %s29
      %s49 = sphi 0, %s49
      %s51 = sphi 0, %s49
      %s52 = sphi 0, %s51
      %s66 = sphi 0, %s52
      %s70 = sphi 0, %s70
      %s72 = sphi 0, %s70
      %s73 = sphi 0, %s72
      %s87 = sphi 0, %s73
      %s93 = sphi 0, %s95
      %s96 = sphi 0, %s93
      %s97 = sphi 0, %s96
      %s113 = sphi 0, %s97
      %s119 = sphi 0, %s121
      %s122 = sphi 0, %s119
      %s123 = sphi 0, %s122
      %s139 = sphi 0, %s123
      %s145 = sphi 0, %s147
      %s148 = sphi 0, %s145
      %s149 = sphi 0, %s148
      %s165 = sphi 0, %s149
    $region4: #{_lambda_.3} parent=1 // loop_header_branch
      %18 = sbr.rel (%p16) target = $region8
    $region5: #{_lambda_.3} parent=1 // loop_body
      %s20 = ssub.s32 %s15, 1
      %s21 = ssub.s32 %s15, 2
      %s22 = sadd.s32 %s15, 1
      %s23 = ssub.s32 %s15, %s22
      %p24 = scmp.eq.s32.totalorder %s23, 0
      %s26 = sadd.s32 %s25, 1
      %s27 = scalar_select %p24, %s25, %s26
      %p30 = pneg %p24
      %p31 = scmp.eq.s32.totalorder %s15, 1
      %p32 = por %p30, %p31
      %p33 = scmp.ne.s32.totalorder %s25, %s28
      %p34 = scmp.eq.s32.totalorder %s15, 0
      %p35 = por %p33, %p34
      %p36 = scmp.ne.s32.totalorder %s25, %s28
      %p37 = scmp.eq.s32.totalorder %s20, 1
      %p38 = por %p36, %p37
      %p39 = scmp.ne.s32.totalorder %s28, %s29
      %p40 = scmp.eq.s32.totalorder %s20, 0
      %p41 = por %p39, %p40
      %p42 = scmp.ne.s32.totalorder %s28, %s29
      %p43 = scmp.eq.s32.totalorder %s21, 1
      %p44 = por %p42, %p43
      %p46 = scmp.ne.s32.totalorder %s29, %s45
      %p47 = scmp.eq.s32.totalorder %s21, 0
      %p48 = por %p46, %p47
      %s50 = sadd.s32 %s49, 1
      %p53 = scmp.eq.s32.totalorder %s15, 1
      %p54 = scmp.ne.s32.totalorder %s49, %s51
      %p55 = scmp.eq.s32.totalorder %s15, 0
      %p56 = por %p54, %p55
      %p57 = scmp.ne.s32.totalorder %s49, %s51
      %p58 = scmp.eq.s32.totalorder %s20, 1
      %p59 = por %p57, %p58
      %p60 = scmp.ne.s32.totalorder %s51, %s52
      %p61 = scmp.eq.s32.totalorder %s20, 0
      %p62 = por %p60, %p61
      %p63 = scmp.ne.s32.totalorder %s51, %s52
      %p64 = scmp.eq.s32.totalorder %s21, 1
      %p65 = por %p63, %p64
      %p67 = scmp.ne.s32.totalorder %s52, %s66
      %p68 = scmp.eq.s32.totalorder %s21, 0
      %p69 = por %p67, %p68
      %s71 = sadd.s32 %s70, 1
      %p74 = scmp.eq.s32.totalorder %s15, 1
      %p75 = scmp.ne.s32.totalorder %s70, %s72
      %p76 = scmp.eq.s32.totalorder %s15, 0
      %p77 = por %p75, %p76
      %p78 = scmp.ne.s32.totalorder %s70, %s72
      %p79 = scmp.eq.s32.totalorder %s20, 1
      %p80 = por %p78, %p79
      %p81 = scmp.ne.s32.totalorder %s72, %s73
      %p82 = scmp.eq.s32.totalorder %s20, 0
      %p83 = por %p81, %p82
      %p84 = scmp.ne.s32.totalorder %s72, %s73
      %p85 = scmp.eq.s32.totalorder %s21, 1
      %p86 = por %p84, %p85
      %p88 = scmp.ne.s32.totalorder %s73, %s87
      %p89 = scmp.eq.s32.totalorder %s21, 0
      %p90 = por %p88, %p89
      %s91 = ssub.s32 %s15, %s22
      %p92 = scmp.eq.s32.totalorder %s91, 0
      %s94 = sadd.s32 %s93, 1
      %s95 = scalar_select %p92, %s93, %s94
      %p98 = pneg %p92
      %p99 = scmp.eq.s32.totalorder %s15, 1
      %p100 = por %p98, %p99
      %p101 = scmp.ne.s32.totalorder %s93, %s96
      %p102 = scmp.eq.s32.totalorder %s15, 0
      %p103 = por %p101, %p102
      %p104 = scmp.ne.s32.totalorder %s93, %s96
      %p105 = scmp.eq.s32.totalorder %s20, 1
      %p106 = por %p104, %p105
      %p107 = scmp.ne.s32.totalorder %s96, %s97
      %p108 = scmp.eq.s32.totalorder %s20, 0
      %p109 = por %p107, %p108
      %p110 = scmp.ne.s32.totalorder %s96, %s97
      %p111 = scmp.eq.s32.totalorder %s21, 1
      %p112 = por %p110, %p111
      %p114 = scmp.ne.s32.totalorder %s97, %s113
      %p115 = scmp.eq.s32.totalorder %s21, 0
      %p116 = por %p114, %p115
      %s117 = ssub.s32 %s15, %s22
      %p118 = scmp.eq.s32.totalorder %s117, 0
      %s120 = sadd.s32 %s119, 1
      %s121 = scalar_select %p118, %s119, %s120
      %p124 = pneg %p118
      %p125 = scmp.eq.s32.totalorder %s15, 1
      %p126 = por %p124, %p125
      %p127 = scmp.ne.s32.totalorder %s119, %s122
      %p128 = scmp.eq.s32.totalorder %s15, 0
      %p129 = por %p127, %p128
      %p130 = scmp.ne.s32.totalorder %s119, %s122
      %p131 = scmp.eq.s32.totalorder %s20, 1
      %p132 = por %p130, %p131
      %p133 = scmp.ne.s32.totalorder %s122, %s123
      %p134 = scmp.eq.s32.totalorder %s20, 0
      %p135 = por %p133, %p134
      %p136 = scmp.ne.s32.totalorder %s122, %s123
      %p137 = scmp.eq.s32.totalorder %s21, 1
      %p138 = por %p136, %p137
      %p140 = scmp.ne.s32.totalorder %s123, %s139
      %p141 = scmp.eq.s32.totalorder %s21, 0
      %p142 = por %p140, %p141
      %s143 = ssub.s32 %s15, %s22
      %p144 = scmp.eq.s32.totalorder %s143, 0
      %s146 = sadd.s32 %s145, 1
      %s147 = scalar_select %p144, %s145, %s146
      %p150 = pneg %p144
      %p151 = scmp.eq.s32.totalorder %s15, 1
      %p152 = por %p150, %p151
      %p153 = scmp.ne.s32.totalorder %s145, %s148
      %p154 = scmp.eq.s32.totalorder %s15, 0
      %p155 = por %p153, %p154
      %p156 = scmp.ne.s32.totalorder %s145, %s148
      %p157 = scmp.eq.s32.totalorder %s20, 1
      %p158 = por %p156, %p157
      %p159 = scmp.ne.s32.totalorder %s148, %s149
      %p160 = scmp.eq.s32.totalorder %s20, 0
      %p161 = por %p159, %p160
      %p162 = scmp.ne.s32.totalorder %s148, %s149
      %p163 = scmp.eq.s32.totalorder %s21, 1
      %p164 = por %p162, %p163
      %p166 = scmp.ne.s32.totalorder %s149, %s165
      %p167 = scmp.eq.s32.totalorder %s21, 0
      %p168 = por %p166, %p167
      %p169 = scmp.le.s32.totalorder 1, %s15
      %p170 = scmp.lt.s32.totalorder %s15, 3
      %p171 = pnand %p169, %p170
      %p172 = pneg %p171
      // Predicated region
      $region9: #{_lambda_.3} parent=5 // pred_check
        _
      $region10: #{_lambda_.3} parent=5 // pred_check_branch
        %174 = sbr.rel (%p171) target = $region12
      $region11: #{_lambda_.3} parent=5 // pred_region
        %s175 = ssub.s32 %s15, 1
        // Predicated region
        $region13: #{_lambda_.3} parent=11 // pred_check
          %p176 = pneg %p62
        $region14: #{_lambda_.3} parent=11 // pred_check_branch
          %178 = sbr.rel (%p176) target = $region16
        $region15: #{_lambda_.3} parent=11 // pred_region
          _
        $region16: #{_lambda_.3} parent=11 // pred_fallthru
          _
        // Predicated region
        $region17: #{_lambda_.3} parent=11 // pred_check
          %p179 = pneg %p83
        $region18: #{_lambda_.3} parent=11 // pred_check_branch
          %181 = sbr.rel (%p179) target = $region20
        $region19: #{_lambda_.3} parent=11 // pred_region
          _
        $region20: #{_lambda_.3} parent=11 // pred_fallthru
          _
      $region12: #{_lambda_.3} parent=5 // pred_fallthru
        _
      %p182 = scmp.lt.s32.totalorder %s15, 2
      // Predicated region
      $region21: #{_lambda_.3} parent=5 // pred_check
        %p183 = pneg %p182
      $region22: #{_lambda_.3} parent=5 // pred_check_branch
        %185 = sbr.rel (%p183) target = $region24
      $region23: #{_lambda_.3} parent=5 // pred_region
        // Predicated region
        $region25: #{_lambda_.3} parent=23 // pred_check
          %p186 = pneg %p35
        $region26: #{_lambda_.3} parent=23 // pred_check_branch
          %188 = sbr.rel (%p186) target = $region28
        $region27: #{_lambda_.3} parent=23 // pred_region
          %s189 = sand.u32 %s25, 1
          %s190 = scalar_lea.sflag [#allocation3], %s189
          %s191 = sand.u32 %s25, 1
          %s192 = smul.addr %s191, 16
          %s193 = scalar_lea.vmem [#allocation2], %s192
          %s194 = smul.u32 2, %s15
          %s196 = ssub.s32 256, 256
          %197 = vsyncadd %s190, %s196
          %s198 = smul.addr %s194, 128
          %s199 = scalar_lea.hbm %s0, %s198
          %s200 = sshll.u32 %s193, 4
          %s201 = int_to_ptr.vmem [resolvable:$true] %s200
          %206 = dma.hbm_to_vmem [thread:$0]  %s199, 256, %s201, %s190, 128, 128, 8
        $region28: #{_lambda_.3} parent=23 // pred_fallthru
          _
      $region24: #{_lambda_.3} parent=5 // pred_fallthru
        _
      %p207 = scmp.le.s32.totalorder 1, %s15
      %p208 = scmp.lt.s32.totalorder %s15, 3
      %p209 = pnand %p207, %p208
      %p210 = pneg %p209
      // Predicated region
      $region29: #{_lambda_.3} parent=5 // pred_check
        _
      $region30: #{_lambda_.3} parent=5 // pred_check_branch
        %212 = sbr.rel (%p209) target = $region32
      $region31: #{_lambda_.3} parent=5 // pred_region
        %s213 = ssub.s32 %s15, 1
        %s214 = sand.u32 %s28, 1
        %s215 = scalar_lea.sflag [#allocation3], %s214
        %s216 = sand.u32 %s28, 1
        %s217 = smul.addr %s216, 16
        %s218 = scalar_lea.vmem [#allocation2], %s217
        // Predicated region
        $region33: #{_lambda_.3} parent=31 // pred_check
          %p219 = pneg %p41
        $region34: #{_lambda_.3} parent=31 // pred_check_branch
          %221 = sbr.rel (%p219) target = $region36
        $region35: #{_lambda_.3} parent=31 // pred_region
          %222 = dma.done %s215, 256
        $region36: #{_lambda_.3} parent=31 // pred_fallthru
          _
        %s223 = sand.u32 %s28, 1
        %s224 = scalar_lea.sflag [#allocation3], %s223
        %s225 = sand.u32 %s28, 1
        %s226 = smul.addr %s225, 16
        %s227 = scalar_lea.vmem [#allocation2], %s226
        %p228 = pneg %p41
        %p229 = pneg %p38
        %p230 = pneg %p62
        %p231 = pneg %p59
        %p232 = pneg %p83
        %p233 = pneg %p80
        %p234 = pneg %p109
        %p235 = pneg %p106
        %s236 = smul.u32 2, %s20
        %p237 = scmp.lt.s32.totalorder %s236, 3
        %s238 = scalar_select %p237, %s236, 3
        %s239 = smul.addr %s238, 8
        %s240 = scalar_lea.vmem %s3, %s239
        %p241 = pneg %p135
        %p242 = pneg %p132
        %s243 = smul.u32 2, %s20
        %p244 = scmp.lt.s32.totalorder %s243, 3
        %s245 = scalar_select %p244, %s243, 3
        %s246 = smul.addr %s245, 8
        %s247 = scalar_lea.vmem %s4, %s246
        %p248 = pneg %p161
        %p249 = pneg %p158
        %s250 = smul.u32 2, %s20
        %p251 = scmp.lt.s32.totalorder %s250, 3
        %s252 = scalar_select %p251, %s250, 3
        %s253 = smul.addr %s252, 8
        %s254 = scalar_lea.vmem %s5, %s253
        %s255 = smul.u32 2, %s20
        %s256 = smul.u32 2, %s20
        %p257 = scmp.lt.s32.totalorder %s256, 3
        %s258 = scalar_select %p257, %s256, 3
        %s259 = smul.addr %s258, 8
        %s260 = scalar_lea.vmem %s3, %s259
        %s261 = smul.u32 2, %s20
        %s262 = smul.u32 2, %s20
        %p263 = scmp.lt.s32.totalorder %s262, 3
        %s264 = scalar_select %p263, %s262, 3
        %s265 = smul.addr %s264, 8
        %s266 = scalar_lea.vmem %s4, %s265
        %s267 = smul.u32 2, %s20
        %s268 = smul.u32 2, %s20
        %p269 = scmp.lt.s32.totalorder %s268, 3
        %s270 = scalar_select %p269, %s268, 3
        %s271 = smul.addr %s270, 8
        %s272 = scalar_lea.vmem %s5, %s271
        %s273 = smul.u32 2, %s20
        %v274 = vld [vmem:[%s218] sm:$0xff]
        %v275 = vld [vmem:[%s218 + $0x8] sm:$0xff]
        %v276 = vld [vmem:[%s1] sm:$0xff]
        %v277 = vld [vmem:[%s1 + $0x8] sm:$0xff]
        %v278 = vld [vmem:[%s1 + $0x10] sm:$0xff]
        %v279 = vld [vmem:[%s1 + $0x18] sm:$0xff]
        %v280 = vld [vmem:[%s2] sm:$0x1]
        %v282 = vlaneseq
        %v283 = vshrl.u32 %v282, 7
        %v284 = vsub.s32 0, %v283
        %v285 = vrot.slane %v280, %v284
        %vm287 = vcmask 261120
        %v289 = vsel %vm287, %v274, 0
        %v292 = vsel %vm287, %v275, 0
        %294 = vmatprep.subr.mxu0 0.0
        %295 = vmatpush1.msra.mxu0 %v276
        %296 = vmatprep.subr.mxu0 0.0
        %297 = vmatpush1.msra.mxu0 %v277
        %298 = vmatprep.subr.mxu0 0.0
        %299 = vmatpush1.msra.mxu0 %v278
        %300 = vmatprep.subr.mxu0 0.0
        %301 = vmatpush1.msra.mxu0 %v279
        %302 = vmatprep.subr.mxu0 0.0
        %303 = vmatpush1.msra.mxu0 0.0
        %304 = vmatprep.subr.mxu0 0.0
        %305 = vmatpush1.msra.mxu0 0.0
        %306 = vmatprep.subr.mxu0 0.0
        %307 = vmatpush1.msra.mxu0 0.0
        %308 = vmatprep.subr.mxu0 0.0
        %309 = vmatpush1.msra.mxu0 0.0
        %310 = vmatprep.subr.mxu0 0.0
        %311 = vmatpush1.msra.mxu0 0.0
        %312 = vmatprep.subr.mxu0 0.0
        %313 = vmatpush1.msra.mxu0 0.0
        %314 = vmatprep.subr.mxu0 0.0
        %315 = vmatpush1.msra.mxu0 0.0
        %316 = vmatprep.subr.mxu0 0.0
        %317 = vmatpush1.msra.mxu0 0.0
        %318 = vmatprep.subr.mxu0 0.0
        %319 = vmatpush1.msra.mxu0 0.0
        %320 = vmatprep.subr.mxu0 0.0
        %321 = vmatpush1.msra.mxu0 0.0
        %322 = vmatprep.subr.mxu0 0.0
        %323 = vmatpush1.msra.mxu0 0.0
        %324 = vmatprep.subr.mxu0 0.0
        %325 = vmatpush1.msra.mxu0 0.0
        %326 = vmatprep.subr.mxu0 0.0
        %327 = vmatpush1.msra.mxu0 0.0
        %328 = vmatprep.subr.mxu0 0.0
        %329 = vmatpush1.msra.mxu0 0.0
        %330 = vmatprep.subr.mxu0 0.0
        %331 = vmatpush1.msra.mxu0 0.0
        %332 = vmatprep.subr.mxu0 0.0
        %333 = vmatpush1.msra.mxu0 0.0
        %334 = vmatprep.subr.mxu0 0.0
        %335 = vmatpush1.msra.mxu0 0.0
        %336 = vmatprep.subr.mxu0 0.0
        %337 = vmatpush1.msra.mxu0 0.0
        %338 = vmatprep.subr.mxu0 0.0
        %339 = vmatpush1.msra.mxu0 0.0
        %340 = vmatprep.subr.mxu0 0.0
        %341 = vmatpush1.msra.mxu0 0.0
        %342 = vmatprep.subr.mxu0 0.0
        %343 = vmatpush1.msra.mxu0 0.0
        %344 = vmatprep.subr.mxu0 0.0
        %345 = vmatpush1.msra.mxu0 0.0
        %346 = vmatprep.subr.mxu0 0.0
        %347 = vmatpush1.msra.mxu0 0.0
        %348 = vmatprep.subr.mxu0 0.0
        %349 = vmatpush1.msra.mxu0 0.0
        %350 = vmatprep.subr.mxu0 0.0
        %351 = vmatpush1.msra.mxu0 0.0
        %352 = vmatprep.subr.mxu0 0.0
        %353 = vmatpush1.msra.mxu0 0.0
        %354 = vmatprep.subr.mxu0 0.0
        %355 = vmatpush1.msra.mxu0 0.0
        %356 = vmatprep.subr.mxu0 0.0
        %357 = vmatpush1.msra.mxu0 0.0
        %358 = vmatprep.mubr.f32.mxu0 0.0
        %359 = vmatmul.mubr.f32.gmra.mrb[0].mxu0 %v289
        %v360 = vpop.f32.mrb[0].mxu0
        %v361 = vadd.f32 %v285, %v360
        %v362 = vpop.f32.mrb[0].mxu0
        %363 = vmatprep.mubr.f32.mxu0 0.0
        %364 = vmatmul.mubr.f32.gmra.mrb[0].mxu0 %v292
        %v365 = vpop.f32.mrb[0].mxu0
        %v366 = vadd.f32 %v285, %v365
        %v367 = vpop.f32.mrb[0].mxu0
        %368 = vdwg.mxu0
        %369 = vst.msk [vmem:[%s260] sm:$0xff] %vm287, %v361
        %370 = vst.msk [vmem:[%s260 + $0x8] sm:$0xff] %vm287, %v366
        %373 = vrot.lane.b32.xlu0 %v361, 96
        %v374 = vpop.permute.xlu0 %373
        %375 = vrot.lane.b32.xlu0 %v366, 96
        %v376 = vpop.permute.xlu0 %375
        %379 = vst.msk [vmem:[%s266] sm:$0xff] %vm287, %v374
        %380 = vst.msk [vmem:[%s266 + $0x8] sm:$0xff] %vm287, %v376
        %381 = vrot.lane.b32.xlu0 %v361, 64
        %v382 = vpop.permute.xlu0 %381
        %383 = vrot.lane.b32.xlu0 %v366, 64
        %v384 = vpop.permute.xlu0 %383
        %387 = vst.msk [vmem:[%s272] sm:$0xff] %vm287, %v382
        %388 = vst.msk [vmem:[%s272 + $0x8] sm:$0xff] %vm287, %v384
        %s389 = smul.u32 2, %s20
        %p390 = scmp.lt.s32.totalorder %s389, 3
        %s391 = scalar_select %p390, %s389, 3
        %s392 = smul.addr %s391, 8
        %s393 = scalar_lea.vmem %s3, %s392
        %s394 = smul.u32 2, %s20
        %p395 = scmp.lt.s32.totalorder %s394, 3
        %s396 = scalar_select %p395, %s394, 3
        %s397 = smul.addr %s396, 8
        %s398 = scalar_lea.vmem %s4, %s397
        %s399 = smul.u32 2, %s20
        %p400 = scmp.lt.s32.totalorder %s399, 3
        %s401 = scalar_select %p400, %s399, 3
        %s402 = smul.addr %s401, 8
        %s403 = scalar_lea.vmem %s5, %s402
        // Predicated region
        $region37: #{_lambda_.3} parent=31 // pred_check
          %p404 = pneg %p106
        $region38: #{_lambda_.3} parent=31 // pred_check_branch
          %406 = sbr.rel (%p404) target = $region40
        $region39: #{_lambda_.3} parent=31 // pred_region
          %s407 = smul.u32 2, %s20
        $region40: #{_lambda_.3} parent=31 // pred_fallthru
          _
        // Predicated region
        $region41: #{_lambda_.3} parent=31 // pred_check
          %p408 = pneg %p132
        $region42: #{_lambda_.3} parent=31 // pred_check_branch
          %410 = sbr.rel (%p408) target = $region44
        $region43: #{_lambda_.3} parent=31 // pred_region
          %s411 = smul.u32 2, %s20
        $region44: #{_lambda_.3} parent=31 // pred_fallthru
          _
        // Predicated region
        $region45: #{_lambda_.3} parent=31 // pred_check
          %p412 = pneg %p158
        $region46: #{_lambda_.3} parent=31 // pred_check_branch
          %414 = sbr.rel (%p412) target = $region48
        $region47: #{_lambda_.3} parent=31 // pred_region
          %s415 = smul.u32 2, %s20
        $region48: #{_lambda_.3} parent=31 // pred_fallthru
          _
      $region32: #{_lambda_.3} parent=5 // pred_fallthru
        _
      %p416 = scmp.le.s32.totalorder 2, %s15
      // Predicated region
      $region49: #{_lambda_.3} parent=5 // pred_check
        %p417 = pneg %p416
      $region50: #{_lambda_.3} parent=5 // pred_check_branch
        %419 = sbr.rel (%p417) target = $region52
      $region51: #{_lambda_.3} parent=5 // pred_region
        %s420 = ssub.s32 %s15, 2
        // Predicated region
        $region53: #{_lambda_.3} parent=51 // pred_check
          %p421 = pneg %p112
        $region54: #{_lambda_.3} parent=51 // pred_check_branch
          %423 = sbr.rel (%p421) target = $region56
        $region55: #{_lambda_.3} parent=51 // pred_region
          %s424 = smul.u32 2, %s21
          %p425 = scmp.lt.s32.totalorder %s424, 3
          %s426 = scalar_select %p425, %s424, 3
          %s427 = smul.addr %s426, 8
          %s428 = scalar_lea.vmem %s3, %s427
        $region56: #{_lambda_.3} parent=51 // pred_fallthru
          _
        // Predicated region
        $region57: #{_lambda_.3} parent=51 // pred_check
          %p429 = pneg %p138
        $region58: #{_lambda_.3} parent=51 // pred_check_branch
          %431 = sbr.rel (%p429) target = $region60
        $region59: #{_lambda_.3} parent=51 // pred_region
          %s432 = smul.u32 2, %s21
          %p433 = scmp.lt.s32.totalorder %s432, 3
          %s434 = scalar_select %p433, %s432, 3
          %s435 = smul.addr %s434, 8
          %s436 = scalar_lea.vmem %s4, %s435
        $region60: #{_lambda_.3} parent=51 // pred_fallthru
          _
        // Predicated region
        $region61: #{_lambda_.3} parent=51 // pred_check
          %p437 = pneg %p164
        $region62: #{_lambda_.3} parent=51 // pred_check_branch
          %439 = sbr.rel (%p437) target = $region64
        $region63: #{_lambda_.3} parent=51 // pred_region
          %s440 = smul.u32 2, %s21
          %p441 = scmp.lt.s32.totalorder %s440, 3
          %s442 = scalar_select %p441, %s440, 3
          %s443 = smul.addr %s442, 8
          %s444 = scalar_lea.vmem %s5, %s443
        $region64: #{_lambda_.3} parent=51 // pred_fallthru
          _
      $region52: #{_lambda_.3} parent=5 // pred_fallthru
        _
    $region6: #{_lambda_.3} parent=1 // loop_footer
      %s19 = sadd.s32 1, %s15
    $region7: #{_lambda_.3} parent=1 // loop_footer_branch
      %14 = sbr.rel target = $region3
    $region8: #{_lambda_.3} parent=1 // loop_exit
      _
    %445 = vsyncpa [#allocation3], 1
    %s446 = scalar_lea.sflag [#allocation3], 1
    %447 = vsyncpa %s446, 1

// kernel: _lambda_.4
$region0: #{_lambda_.4}
  #allocation0 [shape = 'u32[]', space=smem, size = 0x4, offset = 0x4, fixed_abs, tag = 'smem constant byte address 0x4 - core index']
  #allocation1 [shape = 'u32[144,128]{1,0:T(1,128)}', space=vmem, size = 0x12000, scoped, tag = 'internal scratch']
  #allocation2 [shape = 'f32[32,32]{1,0:T(8,128)}', space=vmem, size = 0x4000, scoped, tag = 'scratch operand']
  #allocation3 [shape = 's32[1]{0}', space=sflag, size = 0x4, scoped, tag = 'scoped memory for _lambda_.4']
  #allocation4 [shape = 'u8[512]{0}', space=smem, size = 0x200, scoped, tag = 'prefetched SMEM operand 0']
  %s0 = inlined_call_operand.vmem [shape: s32[2], index: 0, kind: input, shape index: {}]
  %s1 = inlined_call_operand.vmem [shape: f32[2,16,32], index: 1, kind: input, shape index: {}]
  %s2 = inlined_call_operand.vmem [shape: f32[2,16,32], index: 2, kind: input, shape index: {}]
  %s3 = inlined_call_operand.vmem [shape: f32[2,1,2], index: 3, kind: input, shape index: {}]
  %s4 = inlined_call_operand.vmem [shape: f32[32,32], index: 4, kind: input, shape index: {}]
  %s5 = inlined_call_operand.vmem [shape: f32[1,32], index: 5, kind: input, shape index: {}]
  %s6 = inlined_call_operand.vmem [shape: f32[16,16], index: 6, kind: input, shape index: {}]
  %s7 = inlined_call_operand.vmem [shape: f32[2,16,32], index: 7, kind: output, shape index: {}]
  %s8 = sld [smem:[#allocation0]]
  $region57: #{_lambda_.4} parent=0
    _
  %s10 = ssub.s32 1, %s8
  %s11 = scalar_select 0, %s10, %s8
  %s12 = sshll.u32 %s0, 4
  %s13 = int_to_ptr.vmem [resolvable:$true] %s12
  %15 = dma.vmem_to_smem %s13, 16, [#allocation4], [#allocation3]
  %16 = dma.done [#allocation3], 16
  %17 = sfence
  loop: start=0, step=1, limit=4
  $region2: #{_lambda_.4} parent=0 // loop_pre_header
    _
  $region3: #{_lambda_.4} parent=0 // loop_header
    %s19 = sphi 0, %s23
    %p20 = scmp.ge.s32.totalorder %s19, 4
    %s29 = sphi 0, %s31
    %s32 = sphi 0, %s29
    %s33 = sphi 0, %s32
    %s49 = sphi 0, %s33
    %s55 = sphi 0, %s57
    %s58 = sphi 0, %s55
    %s59 = sphi 0, %s58
    %s75 = sphi 0, %s59
    %s81 = sphi 0, %s83
    %s84 = sphi 0, %s81
    %s85 = sphi 0, %s84
    %s101 = sphi 0, %s85
    %s105 = sphi 0, %s105
    %s107 = sphi 0, %s105
    %s108 = sphi 0, %s107
    %s122 = sphi 0, %s108
    %s126 = sphi 0, %s126
    %s128 = sphi 0, %s126
    %s129 = sphi 0, %s128
    %s143 = sphi 0, %s129
    %s147 = sphi 0, %s147
    %s149 = sphi 0, %s147
    %s150 = sphi 0, %s149
    %s164 = sphi 0, %s150
    %s170 = sphi 0, %s172
    %s173 = sphi 0, %s170
    %s174 = sphi 0, %s173
    %s190 = sphi 0, %s174
  $region4: #{_lambda_.4} parent=0 // loop_header_branch
    %22 = sbr.rel (%p20) target = $region8
  $region5: #{_lambda_.4} parent=0 // loop_body
    %s24 = ssub.s32 %s19, 1
    %s25 = ssub.s32 %s19, 2
    %s26 = sadd.s32 %s19, 1
    %s27 = ssub.s32 %s19, %s26
    %p28 = scmp.eq.s32.totalorder %s27, 0
    %s30 = sadd.s32 %s29, 1
    %s31 = scalar_select %p28, %s29, %s30
    %p34 = pneg %p28
    %p35 = scmp.eq.s32.totalorder %s19, 1
    %p36 = por %p34, %p35
    %p37 = scmp.ne.s32.totalorder %s29, %s32
    %p38 = scmp.eq.s32.totalorder %s19, 0
    %p39 = por %p37, %p38
    %p40 = scmp.ne.s32.totalorder %s29, %s32
    %p41 = scmp.eq.s32.totalorder %s24, 1
    %p42 = por %p40, %p41
    %p43 = scmp.ne.s32.totalorder %s32, %s33
    %p44 = scmp.eq.s32.totalorder %s24, 0
    %p45 = por %p43, %p44
    %p46 = scmp.ne.s32.totalorder %s32, %s33
    %p47 = scmp.eq.s32.totalorder %s25, 1
    %p48 = por %p46, %p47
    %p50 = scmp.ne.s32.totalorder %s33, %s49
    %p51 = scmp.eq.s32.totalorder %s25, 0
    %p52 = por %p50, %p51
    %s53 = ssub.s32 %s19, %s26
    %p54 = scmp.eq.s32.totalorder %s53, 0
    %s56 = sadd.s32 %s55, 1
    %s57 = scalar_select %p54, %s55, %s56
    %p60 = pneg %p54
    %p61 = scmp.eq.s32.totalorder %s19, 1
    %p62 = por %p60, %p61
    %p63 = scmp.ne.s32.totalorder %s55, %s58
    %p64 = scmp.eq.s32.totalorder %s19, 0
    %p65 = por %p63, %p64
    %p66 = scmp.ne.s32.totalorder %s55, %s58
    %p67 = scmp.eq.s32.totalorder %s24, 1
    %p68 = por %p66, %p67
    %p69 = scmp.ne.s32.totalorder %s58, %s59
    %p70 = scmp.eq.s32.totalorder %s24, 0
    %p71 = por %p69, %p70
    %p72 = scmp.ne.s32.totalorder %s58, %s59
    %p73 = scmp.eq.s32.totalorder %s25, 1
    %p74 = por %p72, %p73
    %p76 = scmp.ne.s32.totalorder %s59, %s75
    %p77 = scmp.eq.s32.totalorder %s25, 0
    %p78 = por %p76, %p77
    %s79 = ssub.s32 %s19, %s26
    %p80 = scmp.eq.s32.totalorder %s79, 0
    %s82 = sadd.s32 %s81, 1
    %s83 = scalar_select %p80, %s81, %s82
    %p86 = pneg %p80
    %p87 = scmp.eq.s32.totalorder %s19, 1
    %p88 = por %p86, %p87
    %p89 = scmp.ne.s32.totalorder %s81, %s84
    %p90 = scmp.eq.s32.totalorder %s19, 0
    %p91 = por %p89, %p90
    %p92 = scmp.ne.s32.totalorder %s81, %s84
    %p93 = scmp.eq.s32.totalorder %s24, 1
    %p94 = por %p92, %p93
    %p95 = scmp.ne.s32.totalorder %s84, %s85
    %p96 = scmp.eq.s32.totalorder %s24, 0
    %p97 = por %p95, %p96
    %p98 = scmp.ne.s32.totalorder %s84, %s85
    %p99 = scmp.eq.s32.totalorder %s25, 1
    %p100 = por %p98, %p99
    %p102 = scmp.ne.s32.totalorder %s85, %s101
    %p103 = scmp.eq.s32.totalorder %s25, 0
    %p104 = por %p102, %p103
    %s106 = sadd.s32 %s105, 1
    %p109 = scmp.eq.s32.totalorder %s19, 1
    %p110 = scmp.ne.s32.totalorder %s105, %s107
    %p111 = scmp.eq.s32.totalorder %s19, 0
    %p112 = por %p110, %p111
    %p113 = scmp.ne.s32.totalorder %s105, %s107
    %p114 = scmp.eq.s32.totalorder %s24, 1
    %p115 = por %p113, %p114
    %p116 = scmp.ne.s32.totalorder %s107, %s108
    %p117 = scmp.eq.s32.totalorder %s24, 0
    %p118 = por %p116, %p117
    %p119 = scmp.ne.s32.totalorder %s107, %s108
    %p120 = scmp.eq.s32.totalorder %s25, 1
    %p121 = por %p119, %p120
    %p123 = scmp.ne.s32.totalorder %s108, %s122
    %p124 = scmp.eq.s32.totalorder %s25, 0
    %p125 = por %p123, %p124
    %s127 = sadd.s32 %s126, 1
    %p130 = scmp.eq.s32.totalorder %s19, 1
    %p131 = scmp.ne.s32.totalorder %s126, %s128
    %p132 = scmp.eq.s32.totalorder %s19, 0
    %p133 = por %p131, %p132
    %p134 = scmp.ne.s32.totalorder %s126, %s128
    %p135 = scmp.eq.s32.totalorder %s24, 1
    %p136 = por %p134, %p135
    %p137 = scmp.ne.s32.totalorder %s128, %s129
    %p138 = scmp.eq.s32.totalorder %s24, 0
    %p139 = por %p137, %p138
    %p140 = scmp.ne.s32.totalorder %s128, %s129
    %p141 = scmp.eq.s32.totalorder %s25, 1
    %p142 = por %p140, %p141
    %p144 = scmp.ne.s32.totalorder %s129, %s143
    %p145 = scmp.eq.s32.totalorder %s25, 0
    %p146 = por %p144, %p145
    %s148 = sadd.s32 %s147, 1
    %p151 = scmp.eq.s32.totalorder %s19, 1
    %p152 = scmp.ne.s32.totalorder %s147, %s149
    %p153 = scmp.eq.s32.totalorder %s19, 0
    %p154 = por %p152, %p153
    %p155 = scmp.ne.s32.totalorder %s147, %s149
    %p156 = scmp.eq.s32.totalorder %s24, 1
    %p157 = por %p155, %p156
    %p158 = scmp.ne.s32.totalorder %s149, %s150
    %p159 = scmp.eq.s32.totalorder %s24, 0
    %p160 = por %p158, %p159
    %p161 = scmp.ne.s32.totalorder %s149, %s150
    %p162 = scmp.eq.s32.totalorder %s25, 1
    %p163 = por %p161, %p162
    %p165 = scmp.ne.s32.totalorder %s150, %s164
    %p166 = scmp.eq.s32.totalorder %s25, 0
    %p167 = por %p165, %p166
    %s168 = ssub.s32 %s19, %s26
    %p169 = scmp.eq.s32.totalorder %s168, 0
    %s171 = sadd.s32 %s170, 1
    %s172 = scalar_select %p169, %s170, %s171
    %p175 = pneg %p169
    %p176 = scmp.eq.s32.totalorder %s19, 1
    %p177 = por %p175, %p176
    %p178 = scmp.ne.s32.totalorder %s170, %s173
    %p179 = scmp.eq.s32.totalorder %s19, 0
    %p180 = por %p178, %p179
    %p181 = scmp.ne.s32.totalorder %s170, %s173
    %p182 = scmp.eq.s32.totalorder %s24, 1
    %p183 = por %p181, %p182
    %p184 = scmp.ne.s32.totalorder %s173, %s174
    %p185 = scmp.eq.s32.totalorder %s24, 0
    %p186 = por %p184, %p185
    %p187 = scmp.ne.s32.totalorder %s173, %s174
    %p188 = scmp.eq.s32.totalorder %s25, 1
    %p189 = por %p187, %p188
    %p191 = scmp.ne.s32.totalorder %s174, %s190
    %p192 = scmp.eq.s32.totalorder %s25, 0
    %p193 = por %p191, %p192
    %p194 = scmp.le.s32.totalorder 1, %s19
    %p195 = scmp.lt.s32.totalorder %s19, 3
    %p196 = pnand %p194, %p195
    %p197 = pneg %p196
    // Predicated region
    $region9: #{_lambda_.4} parent=5 // pred_check
      _
    $region10: #{_lambda_.4} parent=5 // pred_check_branch
      %199 = sbr.rel (%p196) target = $region12
    $region11: #{_lambda_.4} parent=5 // pred_region
      %s200 = ssub.s32 %s19, 1
      // Predicated region
      $region13: #{_lambda_.4} parent=11 // pred_check
        %p201 = pneg %p118
      $region14: #{_lambda_.4} parent=11 // pred_check_branch
        %203 = sbr.rel (%p201) target = $region16
      $region15: #{_lambda_.4} parent=11 // pred_region
        _
      $region16: #{_lambda_.4} parent=11 // pred_fallthru
        _
      // Predicated region
      $region17: #{_lambda_.4} parent=11 // pred_check
        %p204 = pneg %p139
      $region18: #{_lambda_.4} parent=11 // pred_check_branch
        %206 = sbr.rel (%p204) target = $region20
      $region19: #{_lambda_.4} parent=11 // pred_region
        _
      $region20: #{_lambda_.4} parent=11 // pred_fallthru
        _
      // Predicated region
      $region21: #{_lambda_.4} parent=11 // pred_check
        %p207 = pneg %p160
      $region22: #{_lambda_.4} parent=11 // pred_check_branch
        %209 = sbr.rel (%p207) target = $region24
      $region23: #{_lambda_.4} parent=11 // pred_region
        _
      $region24: #{_lambda_.4} parent=11 // pred_fallthru
        _
    $region12: #{_lambda_.4} parent=5 // pred_fallthru
      _
    %p210 = scmp.lt.s32.totalorder %s19, 2
    // Predicated region
    $region25: #{_lambda_.4} parent=5 // pred_check
      %p211 = pneg %p210
    $region26: #{_lambda_.4} parent=5 // pred_check_branch
      %213 = sbr.rel (%p211) target = $region28
    $region27: #{_lambda_.4} parent=5 // pred_region
      // Predicated region
      $region29: #{_lambda_.4} parent=27 // pred_check
        %p214 = pneg %p39
      $region30: #{_lambda_.4} parent=27 // pred_check_branch
        %216 = sbr.rel (%p214) target = $region32
      $region31: #{_lambda_.4} parent=27 // pred_region
        %p217 = scmp.lt.s32.totalorder %s19, 1
        %s218 = scalar_select %p217, %s19, 1
        %s219 = smul.addr %s218, 2
        %s220 = smul.addr %s219, 8
        %s221 = scalar_lea.vmem %s1, %s220
      $region32: #{_lambda_.4} parent=27 // pred_fallthru
        _
      // Predicated region
      $region33: #{_lambda_.4} parent=27 // pred_check
        %p222 = pneg %p65
      $region34: #{_lambda_.4} parent=27 // pred_check_branch
        %224 = sbr.rel (%p222) target = $region36
      $region35: #{_lambda_.4} parent=27 // pred_region
        %p225 = scmp.lt.s32.totalorder %s19, 1
        %s226 = scalar_select %p225, %s19, 1
        %s227 = smul.addr %s226, 2
        %s228 = smul.addr %s227, 8
        %s229 = scalar_lea.vmem %s2, %s228
      $region36: #{_lambda_.4} parent=27 // pred_fallthru
        _
      // Predicated region
      $region37: #{_lambda_.4} parent=27 // pred_check
        %p230 = pneg %p91
      $region38: #{_lambda_.4} parent=27 // pred_check_branch
        %232 = sbr.rel (%p230) target = $region40
      $region39: #{_lambda_.4} parent=27 // pred_region
        %p233 = scmp.lt.s32.totalorder %s19, 1
        %s234 = scalar_select %p233, %s19, 1
        %s235 = scalar_lea.vmem %s3, %s234
      $region40: #{_lambda_.4} parent=27 // pred_fallthru
        _
    $region28: #{_lambda_.4} parent=5 // pred_fallthru
      _
    %p236 = scmp.le.s32.totalorder 1, %s19
    %p237 = scmp.lt.s32.totalorder %s19, 3
    %p238 = pnand %p236, %p237
    %p239 = pneg %p238
    // Predicated region
    $region41: #{_lambda_.4} parent=5 // pred_check
      _
    $region42: #{_lambda_.4} parent=5 // pred_check_branch
      %241 = sbr.rel (%p238) target = $region44
    $region43: #{_lambda_.4} parent=5 // pred_region
      %s242 = ssub.s32 %s19, 1
      %p243 = scmp.lt.s32.totalorder %s24, 1
      %s244 = scalar_select %p243, %s24, 1
      %s245 = smul.addr %s244, 2
      %s246 = smul.addr %s245, 8
      %s247 = scalar_lea.vmem %s1, %s246
      %p248 = pneg %p45
      %p249 = pneg %p42
      %p250 = scmp.lt.s32.totalorder %s24, 1
      %s251 = scalar_select %p250, %s24, 1
      %s252 = smul.addr %s251, 2
      %s253 = smul.addr %s252, 8
      %s254 = scalar_lea.vmem %s2, %s253
      %p255 = pneg %p71
      %p256 = pneg %p68
      %p257 = scmp.lt.s32.totalorder %s24, 1
      %s258 = scalar_select %p257, %s24, 1
      %s259 = scalar_lea.vmem %s3, %s258
      %p260 = pneg %p97
      %p261 = pneg %p94
      %p262 = pneg %p118
      %p263 = pneg %p115
      %p264 = pneg %p139
      %p265 = pneg %p136
      %p266 = pneg %p160
      %p267 = pneg %p157
      %p268 = pneg %p186
      %p269 = pneg %p183
      %p270 = scmp.lt.s32.totalorder %s24, 1
      %s271 = scalar_select %p270, %s24, 1
      %s272 = smul.addr %s271, 2
      %s273 = smul.addr %s272, 8
      %s274 = scalar_lea.vmem %s7, %s273
      %p275 = scmp.lt.s32.totalorder %s24, 1
      %s276 = scalar_select %p275, %s24, 1
      %s277 = smul.addr %s276, 2
      %s278 = smul.addr %s277, 8
      %s279 = scalar_lea.vmem %s1, %s278
      %p280 = scmp.lt.s32.totalorder %s24, 1
      %s281 = scalar_select %p280, %s24, 1
      %s282 = smul.addr %s281, 2
      %s283 = smul.addr %s282, 8
      %s284 = scalar_lea.vmem %s2, %s283
      %p285 = scmp.lt.s32.totalorder %s24, 1
      %s286 = scalar_select %p285, %s24, 1
      %s287 = scalar_lea.vmem %s3, %s286
      %p288 = scmp.lt.s32.totalorder %s24, 1
      %s289 = scalar_select %p288, %s24, 1
      %s290 = smul.addr %s289, 2
      %s291 = smul.addr %s290, 8
      %s292 = scalar_lea.vmem %s7, %s291
      %v293 = vld [vmem:[%s284] sm:$0xff]
      %v294 = vld [vmem:[%s284 + $0x8] sm:$0xff]
      %vm295 = vcmask 261120
      %296 = vst.msk [vmem:[#allocation2] sm:$0xff] %vm295, %v293
      %297 = vst.msk [vmem:[#allocation2 + $0x8] sm:$0xff] %vm295, %v294
      %298 = vst.msk [vmem:[#allocation2 + $0x10] sm:$0xff] %vm295, %v293
      %299 = vst.msk [vmem:[#allocation2 + $0x18] sm:$0xff] %vm295, %v294
      %v300 = vld [vmem:[%s287] sm:$0x1]
      %s301 = sld [smem:[#allocation4]]
      %s302 = scalar_lea.vmem [#allocation2], %s301
      %v303 = vld [vmem:[%s302] sm:$0xff]
      %v304 = vld [vmem:[%s302 + $0x8] sm:$0xff]
      %v306 = vlaneseq
      %v307 = vshrl.u32 %v306, 7
      %v308 = vsub.s32 0, %v307
      %v309 = vrot.slane %v300, %v308
      %310 = vset.pattern.permute.xlu0 0
      %311 = vperm.xlu0 %310, %v309
      %v312 = vpop.permute.xlu0 %311
      %v314 = vmul.f32 %v312, %v303
      %v315 = vmul.f32 %v312, %v304
      %v316 = vadd.f32 %v314, 0.0
      %v317 = vadd.f32 %v315, 0.0
      %s318 = sld [smem:[#allocation4 + $0x1]]
      %s319 = scalar_lea.vmem [#allocation2], %s318
      %v320 = vld [vmem:[%s319] sm:$0xff]
      %v321 = vld [vmem:[%s319 + $0x8] sm:$0xff]
      %322 = vset.pattern.permute.xlu0 1
      %323 = vperm.xlu0 %322, %v309
      %v324 = vpop.permute.xlu0 %323
      %v326 = vmul.f32 %v324, %v320
      %v327 = vmul.f32 %v324, %v321
      %v328 = vadd.f32 %v316, %v326
      %v329 = vadd.f32 %v317, %v327
      %v330 = vld [vmem:[%s4] sm:$0xff]
      %v331 = vld [vmem:[%s4 + $0x8] sm:$0xff]
      %v332 = vld [vmem:[%s4 + $0x10] sm:$0xff]
      %v333 = vld [vmem:[%s4 + $0x18] sm:$0xff]
      %v334 = vld [vmem:[%s5] sm:$0x1]
      %v336 = vlaneseq
      %v337 = vshrl.u32 %v336, 7
      %v338 = vsub.s32 0, %v337
      %v339 = vrot.slane %v334, %v338
      %v342 = vsel %vm295, %v328, 0
      %v345 = vsel %vm295, %v329, 0
      %347 = vmatprep.subr.mxu0 0.0
      %348 = vmatpush1.msra.mxu0 %v330
      %349 = vmatprep.subr.mxu0 0.0
      %350 = vmatpush1.msra.mxu0 %v331
      %351 = vmatprep.subr.mxu0 0.0
      %352 = vmatpush1.msra.mxu0 %v332
      %353 = vmatprep.subr.mxu0 0.0
      %354 = vmatpush1.msra.mxu0 %v333
      %355 = vmatprep.subr.mxu0 0.0
      %356 = vmatpush1.msra.mxu0 0.0
      %357 = vmatprep.subr.mxu0 0.0
      %358 = vmatpush1.msra.mxu0 0.0
      %359 = vmatprep.subr.mxu0 0.0
      %360 = vmatpush1.msra.mxu0 0.0
      %361 = vmatprep.subr.mxu0 0.0
      %362 = vmatpush1.msra.mxu0 0.0
      %363 = vmatprep.subr.mxu0 0.0
      %364 = vmatpush1.msra.mxu0 0.0
      %365 = vmatprep.subr.mxu0 0.0
      %366 = vmatpush1.msra.mxu0 0.0
      %367 = vmatprep.subr.mxu0 0.0
      %368 = vmatpush1.msra.mxu0 0.0
      %369 = vmatprep.subr.mxu0 0.0
      %370 = vmatpush1.msra.mxu0 0.0
      %371 = vmatprep.subr.mxu0 0.0
      %372 = vmatpush1.msra.mxu0 0.0
      %373 = vmatprep.subr.mxu0 0.0
      %374 = vmatpush1.msra.mxu0 0.0
      %375 = vmatprep.subr.mxu0 0.0
      %376 = vmatpush1.msra.mxu0 0.0
      %377 = vmatprep.subr.mxu0 0.0
      %378 = vmatpush1.msra.mxu0 0.0
      %379 = vmatprep.subr.mxu0 0.0
      %380 = vmatpush1.msra.mxu0 0.0
      %381 = vmatprep.subr.mxu0 0.0
      %382 = vmatpush1.msra.mxu0 0.0
      %383 = vmatprep.subr.mxu0 0.0
      %384 = vmatpush1.msra.mxu0 0.0
      %385 = vmatprep.subr.mxu0 0.0
      %386 = vmatpush1.msra.mxu0 0.0
      %387 = vmatprep.subr.mxu0 0.0
      %388 = vmatpush1.msra.mxu0 0.0
      %389 = vmatprep.subr.mxu0 0.0
      %390 = vmatpush1.msra.mxu0 0.0
      %391 = vmatprep.subr.mxu0 0.0
      %392 = vmatpush1.msra.mxu0 0.0
      %393 = vmatprep.subr.mxu0 0.0
      %394 = vmatpush1.msra.mxu0 0.0
      %395 = vmatprep.subr.mxu0 0.0
      %396 = vmatpush1.msra.mxu0 0.0
      %397 = vmatprep.subr.mxu0 0.0
      %398 = vmatpush1.msra.mxu0 0.0
      %399 = vmatprep.subr.mxu0 0.0
      %400 = vmatpush1.msra.mxu0 0.0
      %401 = vmatprep.subr.mxu0 0.0
      %402 = vmatpush1.msra.mxu0 0.0
      %403 = vmatprep.subr.mxu0 0.0
      %404 = vmatpush1.msra.mxu0 0.0
      %405 = vmatprep.subr.mxu0 0.0
      %406 = vmatpush1.msra.mxu0 0.0
      %407 = vmatprep.subr.mxu0 0.0
      %408 = vmatpush1.msra.mxu0 0.0
      %409 = vmatprep.subr.mxu0 0.0
      %410 = vmatpush1.msra.mxu0 0.0
      %411 = vmatprep.mubr.f32.mxu0 0.0
      %412 = vmatmul.mubr.f32.gmra.mrb[0].mxu0 %v342
      %v413 = vpop.f32.mrb[0].mxu0
      %v414 = vadd.f32 %v339, %v413
      %v415 = vpop.f32.mrb[0].mxu0
      %416 = vmatprep.mubr.f32.mxu0 0.0
      %417 = vmatmul.mubr.f32.gmra.mrb[0].mxu0 %v345
      %v418 = vpop.f32.mrb[0].mxu0
      %v419 = vadd.f32 %v339, %v418
      %v420 = vpop.f32.mrb[0].mxu0
      %421 = vdwg.mxu0
      %v422 = vld [vmem:[%s279] sm:$0xff]
      %v423 = vld [vmem:[%s279 + $0x8] sm:$0xff]
      %v424 = vadd.f32 %v422, %v414
      %v425 = vadd.f32 %v423, %v419
      %v426 = vld [vmem:[%s6] sm:$0xff]
      %v427 = vld [vmem:[%s6 + $0x8] sm:$0xff]
      %vm428 = vcmask 130048
      %v430 = vsel %vm428, %v426, 0
      %v433 = vsel %vm428, %v427, 0
      %435 = vmatprep.subr.mxu0 0.0
      %436 = vmatpush1.msra.mxu0 %v424
      %437 = vmatprep.subr.mxu0 0.0
      %438 = vmatpush1.msra.mxu0 %v425
      %439 = vmatprep.subr.mxu0 0.0
      %440 = vmatpush1.msra.mxu0 0.0
      %441 = vmatprep.subr.mxu0 0.0
      %442 = vmatpush1.msra.mxu0 0.0
      %443 = vmatprep.subr.mxu0 0.0
      %444 = vmatpush1.msra.mxu0 0.0
      %445 = vmatprep.subr.mxu0 0.0
      %446 = vmatpush1.msra.mxu0 0.0
      %447 = vmatprep.subr.mxu0 0.0
      %448 = vmatpush1.msra.mxu0 0.0
      %449 = vmatprep.subr.mxu0 0.0
      %450 = vmatpush1.msra.mxu0 0.0
      %451 = vmatprep.subr.mxu0 0.0
      %452 = vmatpush1.msra.mxu0 0.0
      %453 = vmatprep.subr.mxu0 0.0
      %454 = vmatpush1.msra.mxu0 0.0
      %455 = vmatprep.subr.mxu0 0.0
      %456 = vmatpush1.msra.mxu0 0.0
      %457 = vmatprep.subr.mxu0 0.0
      %458 = vmatpush1.msra.mxu0 0.0
      %459 = vmatprep.subr.mxu0 0.0
      %460 = vmatpush1.msra.mxu0 0.0
      %461 = vmatprep.subr.mxu0 0.0
      %462 = vmatpush1.msra.mxu0 0.0
      %463 = vmatprep.subr.mxu0 0.0
      %464 = vmatpush1.msra.mxu0 0.0
      %465 = vmatprep.subr.mxu0 0.0
      %466 = vmatpush1.msra.mxu0 0.0
      %467 = vmatprep.subr.mxu0 0.0
      %468 = vmatpush1.msra.mxu0 0.0
      %469 = vmatprep.subr.mxu0 0.0
      %470 = vmatpush1.msra.mxu0 0.0
      %471 = vmatprep.subr.mxu0 0.0
      %472 = vmatpush1.msra.mxu0 0.0
      %473 = vmatprep.subr.mxu0 0.0
      %474 = vmatpush1.msra.mxu0 0.0
      %475 = vmatprep.subr.mxu0 0.0
      %476 = vmatpush1.msra.mxu0 0.0
      %477 = vmatprep.subr.mxu0 0.0
      %478 = vmatpush1.msra.mxu0 0.0
      %479 = vmatprep.subr.mxu0 0.0
      %480 = vmatpush1.msra.mxu0 0.0
      %481 = vmatprep.subr.mxu0 0.0
      %482 = vmatpush1.msra.mxu0 0.0
      %483 = vmatprep.subr.mxu0 0.0
      %484 = vmatpush1.msra.mxu0 0.0
      %485 = vmatprep.subr.mxu0 0.0
      %486 = vmatpush1.msra.mxu0 0.0
      %487 = vmatprep.subr.mxu0 0.0
      %488 = vmatpush1.msra.mxu0 0.0
      %489 = vmatprep.subr.mxu0 0.0
      %490 = vmatpush1.msra.mxu0 0.0
      %491 = vmatprep.subr.mxu0 0.0
      %492 = vmatpush1.msra.mxu0 0.0
      %493 = vmatprep.subr.mxu0 0.0
      %494 = vmatpush1.msra.mxu0 0.0
      %495 = vmatprep.subr.mxu0 0.0
      %496 = vmatpush1.msra.mxu0 0.0
      %497 = vmatprep.subr.mxu0 0.0
      %498 = vmatpush1.msra.mxu0 0.0
      %499 = vmatprep.mubr.f32.mxu0 0.0
      %500 = vmatmul.mubr.f32.gmra.mrb[0].mxu0 %v430
      %v501 = vpop.f32.mrb[0].mxu0
      %v502 = vadd.f32 0.0, %v501
      %v503 = vpop.f32.mrb[0].mxu0
      %504 = vmatprep.mubr.f32.mxu0 0.0
      %505 = vmatmul.mubr.f32.gmra.mrb[0].mxu0 %v433
      %v506 = vpop.f32.mrb[0].mxu0
      %v507 = vadd.f32 0.0, %v506
      %v508 = vpop.f32.mrb[0].mxu0
      %509 = vdwg.mxu0
      %v510 = vsub.f32 %v424, %v502
      %v511 = vsub.f32 %v425, %v507
      %512 = vst.msk [vmem:[%s292] sm:$0xff] %vm295, %v510
      %513 = vst.msk [vmem:[%s292 + $0x8] sm:$0xff] %vm295, %v511
      %p514 = scmp.lt.s32.totalorder %s24, 1
      %s515 = scalar_select %p514, %s24, 1
      %s516 = smul.addr %s515, 2
      %s517 = smul.addr %s516, 8
      %s518 = scalar_lea.vmem %s7, %s517
      // Predicated region
      $region45: #{_lambda_.4} parent=43 // pred_check
        %p519 = pneg %p183
      $region46: #{_lambda_.4} parent=43 // pred_check_branch
        %521 = sbr.rel (%p519) target = $region48
      $region47: #{_lambda_.4} parent=43 // pred_region
        _
      $region48: #{_lambda_.4} parent=43 // pred_fallthru
        _
    $region44: #{_lambda_.4} parent=5 // pred_fallthru
      _
    %p522 = scmp.le.s32.totalorder 2, %s19
    // Predicated region
    $region49: #{_lambda_.4} parent=5 // pred_check
      %p523 = pneg %p522
    $region50: #{_lambda_.4} parent=5 // pred_check_branch
      %525 = sbr.rel (%p523) target = $region52
    $region51: #{_lambda_.4} parent=5 // pred_region
      %s526 = ssub.s32 %s19, 2
      // Predicated region
      $region53: #{_lambda_.4} parent=51 // pred_check
        %p527 = pneg %p189
      $region54: #{_lambda_.4} parent=51 // pred_check_branch
        %529 = sbr.rel (%p527) target = $region56
      $region55: #{_lambda_.4} parent=51 // pred_region
        %p530 = scmp.lt.s32.totalorder %s25, 1
        %s531 = scalar_select %p530, %s25, 1
        %s532 = smul.addr %s531, 2
        %s533 = smul.addr %s532, 8
        %s534 = scalar_lea.vmem %s7, %s533
      $region56: #{_lambda_.4} parent=51 // pred_fallthru
        _
    $region52: #{_lambda_.4} parent=5 // pred_fallthru
      _
  $region6: #{_lambda_.4} parent=0 // loop_footer
    %s23 = sadd.s32 1, %s19
  $region7: #{_lambda_.4} parent=0 // loop_footer_branch
    %18 = sbr.rel target = $region3
  $region8: #{_lambda_.4} parent=0 // loop_exit
    _

// kernel: _lambda_.5
$region0: #{_lambda_.5}
  #allocation0 [shape = 'u32[]', space=smem, size = 0x4, offset = 0x4, fixed_abs, tag = 'smem constant byte address 0x4 - core index']
  #allocation1 [shape = 'u32[144,128]{1,0:T(1,128)}', space=vmem, size = 0x12000, scoped, tag = 'internal scratch']
  %s0 = inlined_call_operand.vmem [shape: f32[2,16,32], index: 0, kind: input, shape index: {}]
  %s1 = inlined_call_operand.vmem [shape: f32[32,64], index: 1, kind: input, shape index: {}]
  %s2 = inlined_call_operand.vmem [shape: f32[1,64], index: 2, kind: input, shape index: {}]
  %s3 = inlined_call_operand.vmem [shape: f32[64,32], index: 3, kind: input, shape index: {}]
  %s4 = inlined_call_operand.vmem [shape: f32[1,32], index: 4, kind: input, shape index: {}]
  %s5 = inlined_call_operand.vmem [shape: f32[16,16], index: 5, kind: input, shape index: {}]
  %s6 = inlined_call_operand.vmem [shape: f32[1,32], index: 6, kind: input, shape index: {}]
  %s7 = inlined_call_operand.vmem [shape: f32[1,32], index: 7, kind: input, shape index: {}]
  %s8 = inlined_call_operand.hbm [shape: f32[2,16,32], index: 8, kind: output, shape index: {}]
  %s9 = sld [smem:[#allocation0]]
  $region65: #{_lambda_.5} parent=0
    _
  %s11 = ssub.s32 1, %s9
  %s12 = scalar_select 0, %s11, %s9
  $region1: #{_lambda_.5} parent=0
    #allocation2 [shape = 'u8[16384]{0}', space=vmem, size = 0x4000, scoped, tag = 'output window, operand 0']
    #allocation3 [shape = 's32[2]{0}', space=sflag, size = 0x8, scoped, tag = 'scoped memory for _lambda_.5']
    %13 = vsyncpa [#allocation3], 0
    %s14 = scalar_lea.sflag [#allocation3], 1
    %15 = vsyncpa %s14, 0
    loop: start=0, step=1, limit=4
    $region2: #{_lambda_.5} parent=1 // loop_pre_header
      _
    $region3: #{_lambda_.5} parent=1 // loop_header
      %s17 = sphi 0, %s21
      %p18 = scmp.ge.s32.totalorder %s17, 4
      %s27 = sphi 0, %s29
      %s30 = sphi 0, %s27
      %s31 = sphi 0, %s30
      %s47 = sphi 0, %s31
      %s51 = sphi 0, %s51
      %s53 = sphi 0, %s51
      %s54 = sphi 0, %s53
      %s68 = sphi 0, %s54
      %s72 = sphi 0, %s72
      %s74 = sphi 0, %s72
      %s75 = sphi 0, %s74
      %s89 = sphi 0, %s75
      %s93 = sphi 0, %s93
      %s95 = sphi 0, %s93
      %s96 = sphi 0, %s95
      %s110 = sphi 0, %s96
      %s114 = sphi 0, %s114
      %s116 = sphi 0, %s114
      %s117 = sphi 0, %s116
      %s131 = sphi 0, %s117
      %s135 = sphi 0, %s135
      %s137 = sphi 0, %s135
      %s138 = sphi 0, %s137
      %s152 = sphi 0, %s138
      %s156 = sphi 0, %s156
      %s158 = sphi 0, %s156
      %s159 = sphi 0, %s158
      %s173 = sphi 0, %s159
      %s177 = sphi 0, %s177
      %s179 = sphi 0, %s177
      %s180 = sphi 0, %s179
      %s194 = sphi 0, %s180
      %s200 = sphi 0, %s202
      %s203 = sphi 0, %s200
      %s204 = sphi 0, %s203
      %s220 = sphi 0, %s204
    $region4: #{_lambda_.5} parent=1 // loop_header_branch
      %20 = sbr.rel (%p18) target = $region8
    $region5: #{_lambda_.5} parent=1 // loop_body
      %s22 = ssub.s32 %s17, 1
      %s23 = ssub.s32 %s17, 2
      %s24 = sadd.s32 %s17, 1
      %s25 = ssub.s32 %s17, %s24
      %p26 = scmp.eq.s32.totalorder %s25, 0
      %s28 = sadd.s32 %s27, 1
      %s29 = scalar_select %p26, %s27, %s28
      %p32 = pneg %p26
      %p33 = scmp.eq.s32.totalorder %s17, 1
      %p34 = por %p32, %p33
      %p35 = scmp.ne.s32.totalorder %s27, %s30
      %p36 = scmp.eq.s32.totalorder %s17, 0
      %p37 = por %p35, %p36
      %p38 = scmp.ne.s32.totalorder %s27, %s30
      %p39 = scmp.eq.s32.totalorder %s22, 1
      %p40 = por %p38, %p39
      %p41 = scmp.ne.s32.totalorder %s30, %s31
      %p42 = scmp.eq.s32.totalorder %s22, 0
      %p43 = por %p41, %p42
      %p44 = scmp.ne.s32.totalorder %s30, %s31
      %p45 = scmp.eq.s32.totalorder %s23, 1
      %p46 = por %p44, %p45
      %p48 = scmp.ne.s32.totalorder %s31, %s47
      %p49 = scmp.eq.s32.totalorder %s23, 0
      %p50 = por %p48, %p49
      %s52 = sadd.s32 %s51, 1
      %p55 = scmp.eq.s32.totalorder %s17, 1
      %p56 = scmp.ne.s32.totalorder %s51, %s53
      %p57 = scmp.eq.s32.totalorder %s17, 0
      %p58 = por %p56, %p57
      %p59 = scmp.ne.s32.totalorder %s51, %s53
      %p60 = scmp.eq.s32.totalorder %s22, 1
      %p61 = por %p59, %p60
      %p62 = scmp.ne.s32.totalorder %s53, %s54
      %p63 = scmp.eq.s32.totalorder %s22, 0
      %p64 = por %p62, %p63
      %p65 = scmp.ne.s32.totalorder %s53, %s54
      %p66 = scmp.eq.s32.totalorder %s23, 1
      %p67 = por %p65, %p66
      %p69 = scmp.ne.s32.totalorder %s54, %s68
      %p70 = scmp.eq.s32.totalorder %s23, 0
      %p71 = por %p69, %p70
      %s73 = sadd.s32 %s72, 1
      %p76 = scmp.eq.s32.totalorder %s17, 1
      %p77 = scmp.ne.s32.totalorder %s72, %s74
      %p78 = scmp.eq.s32.totalorder %s17, 0
      %p79 = por %p77, %p78
      %p80 = scmp.ne.s32.totalorder %s72, %s74
      %p81 = scmp.eq.s32.totalorder %s22, 1
      %p82 = por %p80, %p81
      %p83 = scmp.ne.s32.totalorder %s74, %s75
      %p84 = scmp.eq.s32.totalorder %s22, 0
      %p85 = por %p83, %p84
      %p86 = scmp.ne.s32.totalorder %s74, %s75
      %p87 = scmp.eq.s32.totalorder %s23, 1
      %p88 = por %p86, %p87
      %p90 = scmp.ne.s32.totalorder %s75, %s89
      %p91 = scmp.eq.s32.totalorder %s23, 0
      %p92 = por %p90, %p91
      %s94 = sadd.s32 %s93, 1
      %p97 = scmp.eq.s32.totalorder %s17, 1
      %p98 = scmp.ne.s32.totalorder %s93, %s95
      %p99 = scmp.eq.s32.totalorder %s17, 0
      %p100 = por %p98, %p99
      %p101 = scmp.ne.s32.totalorder %s93, %s95
      %p102 = scmp.eq.s32.totalorder %s22, 1
      %p103 = por %p101, %p102
      %p104 = scmp.ne.s32.totalorder %s95, %s96
      %p105 = scmp.eq.s32.totalorder %s22, 0
      %p106 = por %p104, %p105
      %p107 = scmp.ne.s32.totalorder %s95, %s96
      %p108 = scmp.eq.s32.totalorder %s23, 1
      %p109 = por %p107, %p108
      %p111 = scmp.ne.s32.totalorder %s96, %s110
      %p112 = scmp.eq.s32.totalorder %s23, 0
      %p113 = por %p111, %p112
      %s115 = sadd.s32 %s114, 1
      %p118 = scmp.eq.s32.totalorder %s17, 1
      %p119 = scmp.ne.s32.totalorder %s114, %s116
      %p120 = scmp.eq.s32.totalorder %s17, 0
      %p121 = por %p119, %p120
      %p122 = scmp.ne.s32.totalorder %s114, %s116
      %p123 = scmp.eq.s32.totalorder %s22, 1
      %p124 = por %p122, %p123
      %p125 = scmp.ne.s32.totalorder %s116, %s117
      %p126 = scmp.eq.s32.totalorder %s22, 0
      %p127 = por %p125, %p126
      %p128 = scmp.ne.s32.totalorder %s116, %s117
      %p129 = scmp.eq.s32.totalorder %s23, 1
      %p130 = por %p128, %p129
      %p132 = scmp.ne.s32.totalorder %s117, %s131
      %p133 = scmp.eq.s32.totalorder %s23, 0
      %p134 = por %p132, %p133
      %s136 = sadd.s32 %s135, 1
      %p139 = scmp.eq.s32.totalorder %s17, 1
      %p140 = scmp.ne.s32.totalorder %s135, %s137
      %p141 = scmp.eq.s32.totalorder %s17, 0
      %p142 = por %p140, %p141
      %p143 = scmp.ne.s32.totalorder %s135, %s137
      %p144 = scmp.eq.s32.totalorder %s22, 1
      %p145 = por %p143, %p144
      %p146 = scmp.ne.s32.totalorder %s137, %s138
      %p147 = scmp.eq.s32.totalorder %s22, 0
      %p148 = por %p146, %p147
      %p149 = scmp.ne.s32.totalorder %s137, %s138
      %p150 = scmp.eq.s32.totalorder %s23, 1
      %p151 = por %p149, %p150
      %p153 = scmp.ne.s32.totalorder %s138, %s152
      %p154 = scmp.eq.s32.totalorder %s23, 0
      %p155 = por %p153, %p154
      %s157 = sadd.s32 %s156, 1
      %p160 = scmp.eq.s32.totalorder %s17, 1
      %p161 = scmp.ne.s32.totalorder %s156, %s158
      %p162 = scmp.eq.s32.totalorder %s17, 0
      %p163 = por %p161, %p162
      %p164 = scmp.ne.s32.totalorder %s156, %s158
      %p165 = scmp.eq.s32.totalorder %s22, 1
      %p166 = por %p164, %p165
      %p167 = scmp.ne.s32.totalorder %s158, %s159
      %p168 = scmp.eq.s32.totalorder %s22, 0
      %p169 = por %p167, %p168
      %p170 = scmp.ne.s32.totalorder %s158, %s159
      %p171 = scmp.eq.s32.totalorder %s23, 1
      %p172 = por %p170, %p171
      %p174 = scmp.ne.s32.totalorder %s159, %s173
      %p175 = scmp.eq.s32.totalorder %s23, 0
      %p176 = por %p174, %p175
      %s178 = sadd.s32 %s177, 1
      %p181 = scmp.eq.s32.totalorder %s17, 1
      %p182 = scmp.ne.s32.totalorder %s177, %s179
      %p183 = scmp.eq.s32.totalorder %s17, 0
      %p184 = por %p182, %p183
      %p185 = scmp.ne.s32.totalorder %s177, %s179
      %p186 = scmp.eq.s32.totalorder %s22, 1
      %p187 = por %p185, %p186
      %p188 = scmp.ne.s32.totalorder %s179, %s180
      %p189 = scmp.eq.s32.totalorder %s22, 0
      %p190 = por %p188, %p189
      %p191 = scmp.ne.s32.totalorder %s179, %s180
      %p192 = scmp.eq.s32.totalorder %s23, 1
      %p193 = por %p191, %p192
      %p195 = scmp.ne.s32.totalorder %s180, %s194
      %p196 = scmp.eq.s32.totalorder %s23, 0
      %p197 = por %p195, %p196
      %s198 = ssub.s32 %s17, %s24
      %p199 = scmp.eq.s32.totalorder %s198, 0
      %s201 = sadd.s32 %s200, 1
      %s202 = scalar_select %p199, %s200, %s201
      %p205 = pneg %p199
      %p206 = scmp.eq.s32.totalorder %s17, 1
      %p207 = por %p205, %p206
      %p208 = scmp.ne.s32.totalorder %s200, %s203
      %p209 = scmp.eq.s32.totalorder %s17, 0
      %p210 = por %p208, %p209
      %p211 = scmp.ne.s32.totalorder %s200, %s203
      %p212 = scmp.eq.s32.totalorder %s22, 1
      %p213 = por %p211, %p212
      %p214 = scmp.ne.s32.totalorder %s203, %s204
      %p215 = scmp.eq.s32.totalorder %s22, 0
      %p216 = por %p214, %p215
      %p217 = scmp.ne.s32.totalorder %s203, %s204
      %p218 = scmp.eq.s32.totalorder %s23, 1
      %p219 = por %p217, %p218
      %p221 = scmp.ne.s32.totalorder %s204, %s220
      %p222 = scmp.eq.s32.totalorder %s23, 0
      %p223 = por %p221, %p222
      %p224 = scmp.le.s32.totalorder 1, %s17
      %p225 = scmp.lt.s32.totalorder %s17, 3
      %p226 = pnand %p224, %p225
      %p227 = pneg %p226
      // Predicated region
      $region9: #{_lambda_.5} parent=5 // pred_check
        _
      $region10: #{_lambda_.5} parent=5 // pred_check_branch
        %229 = sbr.rel (%p226) target = $region12
      $region11: #{_lambda_.5} parent=5 // pred_region
        %s230 = ssub.s32 %s17, 1
        // Predicated region
        $region13: #{_lambda_.5} parent=11 // pred_check
          %p231 = pneg %p64
        $region14: #{_lambda_.5} parent=11 // pred_check_branch
          %233 = sbr.rel (%p231) target = $region16
        $region15: #{_lambda_.5} parent=11 // pred_region
          _
        $region16: #{_lambda_.5} parent=11 // pred_fallthru
          _
        // Predicated region
        $region17: #{_lambda_.5} parent=11 // pred_check
          %p234 = pneg %p85
        $region18: #{_lambda_.5} parent=11 // pred_check_branch
          %236 = sbr.rel (%p234) target = $region20
        $region19: #{_lambda_.5} parent=11 // pred_region
          _
        $region20: #{_lambda_.5} parent=11 // pred_fallthru
          _
        // Predicated region
        $region21: #{_lambda_.5} parent=11 // pred_check
          %p237 = pneg %p106
        $region22: #{_lambda_.5} parent=11 // pred_check_branch
          %239 = sbr.rel (%p237) target = $region24
        $region23: #{_lambda_.5} parent=11 // pred_region
          _
        $region24: #{_lambda_.5} parent=11 // pred_fallthru
          _
        // Predicated region
        $region25: #{_lambda_.5} parent=11 // pred_check
          %p240 = pneg %p127
        $region26: #{_lambda_.5} parent=11 // pred_check_branch
          %242 = sbr.rel (%p240) target = $region28
        $region27: #{_lambda_.5} parent=11 // pred_region
          _
        $region28: #{_lambda_.5} parent=11 // pred_fallthru
          _
        // Predicated region
        $region29: #{_lambda_.5} parent=11 // pred_check
          %p243 = pneg %p148
        $region30: #{_lambda_.5} parent=11 // pred_check_branch
          %245 = sbr.rel (%p243) target = $region32
        $region31: #{_lambda_.5} parent=11 // pred_region
          _
        $region32: #{_lambda_.5} parent=11 // pred_fallthru
          _
        // Predicated region
        $region33: #{_lambda_.5} parent=11 // pred_check
          %p246 = pneg %p169
        $region34: #{_lambda_.5} parent=11 // pred_check_branch
          %248 = sbr.rel (%p246) target = $region36
        $region35: #{_lambda_.5} parent=11 // pred_region
          _
        $region36: #{_lambda_.5} parent=11 // pred_fallthru
          _
        // Predicated region
        $region37: #{_lambda_.5} parent=11 // pred_check
          %p249 = pneg %p190
        $region38: #{_lambda_.5} parent=11 // pred_check_branch
          %251 = sbr.rel (%p249) target = $region40
        $region39: #{_lambda_.5} parent=11 // pred_region
          _
        $region40: #{_lambda_.5} parent=11 // pred_fallthru
          _
      $region12: #{_lambda_.5} parent=5 // pred_fallthru
        _
      %p252 = scmp.lt.s32.totalorder %s17, 2
      // Predicated region
      $region41: #{_lambda_.5} parent=5 // pred_check
        %p253 = pneg %p252
      $region42: #{_lambda_.5} parent=5 // pred_check_branch
        %255 = sbr.rel (%p253) target = $region44
      $region43: #{_lambda_.5} parent=5 // pred_region
        // Predicated region
        $region45: #{_lambda_.5} parent=43 // pred_check
          %p256 = pneg %p37
        $region46: #{_lambda_.5} parent=43 // pred_check_branch
          %258 = sbr.rel (%p256) target = $region48
        $region47: #{_lambda_.5} parent=43 // pred_region
          %p259 = scmp.lt.s32.totalorder %s17, 1
          %s260 = scalar_select %p259, %s17, 1
          %s261 = smul.addr %s260, 2
          %s262 = smul.addr %s261, 8
          %s263 = scalar_lea.vmem %s0, %s262
        $region48: #{_lambda_.5} parent=43 // pred_fallthru
          _
      $region44: #{_lambda_.5} parent=5 // pred_fallthru
        _
      %p264 = scmp.le.s32.totalorder 1, %s17
      %p265 = scmp.lt.s32.totalorder %s17, 3
      %p266 = pnand %p264, %p265
      %p267 = pneg %p266
      // Predicated region
      $region49: #{_lambda_.5} parent=5 // pred_check
        _
      $region50: #{_lambda_.5} parent=5 // pred_check_branch
        %269 = sbr.rel (%p266) target = $region52
      $region51: #{_lambda_.5} parent=5 // pred_region
        %s270 = ssub.s32 %s17, 1
        %p271 = scmp.lt.s32.totalorder %s22, 1
        %s272 = scalar_select %p271, %s22, 1
        %s273 = smul.addr %s272, 2
        %s274 = smul.addr %s273, 8
        %s275 = scalar_lea.vmem %s0, %s274
        %p276 = pneg %p43
        %p277 = pneg %p40
        %p278 = pneg %p64
        %p279 = pneg %p61
        %p280 = pneg %p85
        %p281 = pneg %p82
        %p282 = pneg %p106
        %p283 = pneg %p103
        %p284 = pneg %p127
        %p285 = pneg %p124
        %p286 = pneg %p148
        %p287 = pneg %p145
        %p288 = pneg %p169
        %p289 = pneg %p166
        %p290 = pneg %p190
        %p291 = pneg %p187
        %p292 = pneg %p216
        %p293 = pneg %p213
        %s294 = sand.u32 %s203, 1
        %s295 = scalar_lea.sflag [#allocation3], %s294
        %s296 = sand.u32 %s203, 1
        %s297 = smul.addr %s296, 16
        %s298 = scalar_lea.vmem [#allocation2], %s297
        %p299 = scmp.lt.s32.totalorder %s22, 1
        %s300 = scalar_select %p299, %s22, 1
        %s301 = smul.addr %s300, 2
        %s302 = smul.addr %s301, 8
        %s303 = scalar_lea.vmem %s0, %s302
        %v304 = vld [vmem:[%s303] sm:$0xff]
        %v305 = vld [vmem:[%s303 + $0x8] sm:$0xff]
        %v306 = vld [vmem:[%s1] sm:$0xff]
        %v307 = vld [vmem:[%s1 + $0x8] sm:$0xff]
        %v308 = vld [vmem:[%s1 + $0x10] sm:$0xff]
        %v309 = vld [vmem:[%s1 + $0x18] sm:$0xff]
        %v310 = vld [vmem:[%s2] sm:$0x1]
        %v312 = vlaneseq
        %v313 = vshrl.u32 %v312, 7
        %v314 = vsub.s32 0, %v313
        %v315 = vrot.slane %v310, %v314
        %vm317 = vcmask 261120
        %v319 = vsel %vm317, %v304, 0
        %v322 = vsel %vm317, %v305, 0
        %324 = vmatprep.subr.mxu0 0.0
        %325 = vmatpush1.msra.mxu0 %v306
        %326 = vmatprep.subr.mxu0 0.0
        %327 = vmatpush1.msra.mxu0 %v307
        %328 = vmatprep.subr.mxu0 0.0
        %329 = vmatpush1.msra.mxu0 %v308
        %330 = vmatprep.subr.mxu0 0.0
        %331 = vmatpush1.msra.mxu0 %v309
        %332 = vmatprep.subr.mxu0 0.0
        %333 = vmatpush1.msra.mxu0 0.0
        %334 = vmatprep.subr.mxu0 0.0
        %335 = vmatpush1.msra.mxu0 0.0
        %336 = vmatprep.subr.mxu0 0.0
        %337 = vmatpush1.msra.mxu0 0.0
        %338 = vmatprep.subr.mxu0 0.0
        %339 = vmatpush1.msra.mxu0 0.0
        %340 = vmatprep.subr.mxu0 0.0
        %341 = vmatpush1.msra.mxu0 0.0
        %342 = vmatprep.subr.mxu0 0.0
        %343 = vmatpush1.msra.mxu0 0.0
        %344 = vmatprep.subr.mxu0 0.0
        %345 = vmatpush1.msra.mxu0 0.0
        %346 = vmatprep.subr.mxu0 0.0
        %347 = vmatpush1.msra.mxu0 0.0
        %348 = vmatprep.subr.mxu0 0.0
        %349 = vmatpush1.msra.mxu0 0.0
        %350 = vmatprep.subr.mxu0 0.0
        %351 = vmatpush1.msra.mxu0 0.0
        %352 = vmatprep.subr.mxu0 0.0
        %353 = vmatpush1.msra.mxu0 0.0
        %354 = vmatprep.subr.mxu0 0.0
        %355 = vmatpush1.msra.mxu0 0.0
        %356 = vmatprep.subr.mxu0 0.0
        %357 = vmatpush1.msra.mxu0 0.0
        %358 = vmatprep.subr.mxu0 0.0
        %359 = vmatpush1.msra.mxu0 0.0
        %360 = vmatprep.subr.mxu0 0.0
        %361 = vmatpush1.msra.mxu0 0.0
        %362 = vmatprep.subr.mxu0 0.0
        %363 = vmatpush1.msra.mxu0 0.0
        %364 = vmatprep.subr.mxu0 0.0
        %365 = vmatpush1.msra.mxu0 0.0
        %366 = vmatprep.subr.mxu0 0.0
        %367 = vmatpush1.msra.mxu0 0.0
        %368 = vmatprep.subr.mxu0 0.0
        %369 = vmatpush1.msra.mxu0 0.0
        %370 = vmatprep.subr.mxu0 0.0
        %371 = vmatpush1.msra.mxu0 0.0
        %372 = vmatprep.subr.mxu0 0.0
        %373 = vmatpush1.msra.mxu0 0.0
        %374 = vmatprep.subr.mxu0 0.0
        %375 = vmatpush1.msra.mxu0 0.0
        %376 = vmatprep.subr.mxu0 0.0
        %377 = vmatpush1.msra.mxu0 0.0
        %378 = vmatprep.subr.mxu0 0.0
        %379 = vmatpush1.msra.mxu0 0.0
        %380 = vmatprep.subr.mxu0 0.0
        %381 = vmatpush1.msra.mxu0 0.0
        %382 = vmatprep.subr.mxu0 0.0
        %383 = vmatpush1.msra.mxu0 0.0
        %384 = vmatprep.subr.mxu0 0.0
        %385 = vmatpush1.msra.mxu0 0.0
        %386 = vmatprep.subr.mxu0 0.0
        %387 = vmatpush1.msra.mxu0 0.0
        %388 = vmatprep.mubr.f32.mxu0 0.0
        %389 = vmatmul.mubr.f32.gmra.mrb[0].mxu0 %v319
        %v390 = vpop.f32.mrb[0].mxu0
        %v391 = vadd.f32 %v315, %v390
        %v392 = vpop.f32.mrb[0].mxu0
        %393 = vmatprep.mubr.f32.mxu0 0.0
        %394 = vmatmul.mubr.f32.gmra.mrb[0].mxu0 %v322
        %v395 = vpop.f32.mrb[0].mxu0
        %v396 = vadd.f32 %v315, %v395
        %v397 = vpop.f32.mrb[0].mxu0
        %398 = vdwg.mxu0
        %v399 = vmul.f32 %v391, 0.5
        %v400 = vmul.f32 %v396, 0.5
        %v401 = vmul.f32 %v391, 0.70710677
        %v402 = vmul.f32 %v396, 0.70710677
        %vm403 = vcmp.ge.f32.partialorder %v401, 0.0
        %vm404 = vcmp.ge.f32.partialorder %v402, 0.0
        %v405 = vsel %vm403, 1.0, -1.0
        %v406 = vsel %vm404, 1.0, -1.0
        %v407 = vand.u32 2147483647, %v401
        %v408 = vand.u32 2147483647, %v402
        %v409 = vmul.f32 %v407, 0.3275911
        %v410 = vmul.f32 %v408, 0.3275911
        %v411 = vadd.f32 %v409, 1.0
        %v412 = vadd.f32 %v410, 1.0
        %v413 = vrcp.pop %v411
        %v414 = vmul.f32 1.0, %v413
        %v415 = vrcp.pop %v412
        %v416 = vmul.f32 1.0, %v415
        %v417 = vmul.f32 %v414, 1.0614054
        %v418 = vmul.f32 %v416, 1.0614054
        %v419 = vadd.f32 %v417, -1.4531521
        %v420 = vadd.f32 %v418, -1.4531521
        %v421 = vmul.f32 %v419, %v414
        %v422 = vmul.f32 %v420, %v416
        %v423 = vadd.f32 %v421, 1.4214138
        %v424 = vadd.f32 %v422, 1.4214138
        %v425 = vmul.f32 %v423, %v414
        %v426 = vmul.f32 %v424, %v416
        %v427 = vadd.f32 %v425, -0.28449672
        %v428 = vadd.f32 %v426, -0.28449672
        %v429 = vmul.f32 %v427, %v414
        %v430 = vmul.f32 %v428, %v416
        %v431 = vadd.f32 %v429, 0.2548296
        %v432 = vadd.f32 %v430, 0.2548296
        %v433 = vmul.f32 %v431, %v414
        %v434 = vmul.f32 %v432, %v416
        %v435 = vsub.f32 0.0, %v407
        %v436 = vsub.f32 0.0, %v408
        %v437 = vmul.f32 %v435, %v407
        %v438 = vmul.f32 %v436, %v408
        %v439 = vmul.f32 %v437, 1.442695
        %v440 = vpow.pop %v439
        %v441 = vmul.f32 %v438, 1.442695
        %v442 = vpow.pop %v441
        %v443 = vmul.f32 %v433, %v440
        %v444 = vmul.f32 %v434, %v442
        %v445 = vsub.f32 1.0, %v443
        %v446 = vsub.f32 1.0, %v444
        %v447 = vmul.f32 %v405, %v445
        %v448 = vmul.f32 %v406, %v446
        %v449 = vadd.f32 %v447, 1.0
        %v450 = vadd.f32 %v448, 1.0
        %v451 = vmul.f32 %v399, %v449
        %v452 = vmul.f32 %v400, %v450
        %v453 = vld [vmem:[%s3] sm:$0xff]
        %v454 = vld [vmem:[%s3 + $0x8] sm:$0xff]
        %v455 = vld [vmem:[%s3 + $0x10] sm:$0xff]
        %v456 = vld [vmem:[%s3 + $0x18] sm:$0xff]
        %v457 = vld [vmem:[%s3 + $0x20] sm:$0xff]
        %v458 = vld [vmem:[%s3 + $0x28] sm:$0xff]
        %v459 = vld [vmem:[%s3 + $0x30] sm:$0xff]
        %v460 = vld [vmem:[%s3 + $0x38] sm:$0xff]
        %v461 = vld [vmem:[%s4] sm:$0x1]
        %v463 = vlaneseq
        %v464 = vshrl.u32 %v463, 7
        %v465 = vsub.s32 0, %v464
        %v466 = vrot.slane %v461, %v465
        %vm468 = vcmask 523264
        %v470 = vsel %vm468, %v451, 0
        %v473 = vsel %vm468, %v452, 0
        %475 = vmatprep.subr.mxu0 0.0
        %476 = vmatpush1.msra.mxu0 %v453
        %477 = vmatprep.subr.mxu0 0.0
        %478 = vmatpush1.msra.mxu0 %v454
        %479 = vmatprep.subr.mxu0 0.0
        %480 = vmatpush1.msra.mxu0 %v455
        %481 = vmatprep.subr.mxu0 0.0
        %482 = vmatpush1.msra.mxu0 %v456
        %483 = vmatprep.subr.mxu0 0.0
        %484 = vmatpush1.msra.mxu0 %v457
        %485 = vmatprep.subr.mxu0 0.0
        %486 = vmatpush1.msra.mxu0 %v458
        %487 = vmatprep.subr.mxu0 0.0
        %488 = vmatpush1.msra.mxu0 %v459
        %489 = vmatprep.subr.mxu0 0.0
        %490 = vmatpush1.msra.mxu0 %v460
        %491 = vmatprep.subr.mxu0 0.0
        %492 = vmatpush1.msra.mxu0 0.0
        %493 = vmatprep.subr.mxu0 0.0
        %494 = vmatpush1.msra.mxu0 0.0
        %495 = vmatprep.subr.mxu0 0.0
        %496 = vmatpush1.msra.mxu0 0.0
        %497 = vmatprep.subr.mxu0 0.0
        %498 = vmatpush1.msra.mxu0 0.0
        %499 = vmatprep.subr.mxu0 0.0
        %500 = vmatpush1.msra.mxu0 0.0
        %501 = vmatprep.subr.mxu0 0.0
        %502 = vmatpush1.msra.mxu0 0.0
        %503 = vmatprep.subr.mxu0 0.0
        %504 = vmatpush1.msra.mxu0 0.0
        %505 = vmatprep.subr.mxu0 0.0
        %506 = vmatpush1.msra.mxu0 0.0
        %507 = vmatprep.subr.mxu0 0.0
        %508 = vmatpush1.msra.mxu0 0.0
        %509 = vmatprep.subr.mxu0 0.0
        %510 = vmatpush1.msra.mxu0 0.0
        %511 = vmatprep.subr.mxu0 0.0
        %512 = vmatpush1.msra.mxu0 0.0
        %513 = vmatprep.subr.mxu0 0.0
        %514 = vmatpush1.msra.mxu0 0.0
        %515 = vmatprep.subr.mxu0 0.0
        %516 = vmatpush1.msra.mxu0 0.0
        %517 = vmatprep.subr.mxu0 0.0
        %518 = vmatpush1.msra.mxu0 0.0
        %519 = vmatprep.subr.mxu0 0.0
        %520 = vmatpush1.msra.mxu0 0.0
        %521 = vmatprep.subr.mxu0 0.0
        %522 = vmatpush1.msra.mxu0 0.0
        %523 = vmatprep.subr.mxu0 0.0
        %524 = vmatpush1.msra.mxu0 0.0
        %525 = vmatprep.subr.mxu0 0.0
        %526 = vmatpush1.msra.mxu0 0.0
        %527 = vmatprep.subr.mxu0 0.0
        %528 = vmatpush1.msra.mxu0 0.0
        %529 = vmatprep.subr.mxu0 0.0
        %530 = vmatpush1.msra.mxu0 0.0
        %531 = vmatprep.subr.mxu0 0.0
        %532 = vmatpush1.msra.mxu0 0.0
        %533 = vmatprep.subr.mxu0 0.0
        %534 = vmatpush1.msra.mxu0 0.0
        %535 = vmatprep.subr.mxu0 0.0
        %536 = vmatpush1.msra.mxu0 0.0
        %537 = vmatprep.subr.mxu0 0.0
        %538 = vmatpush1.msra.mxu0 0.0
        %539 = vmatprep.mubr.f32.mxu0 0.0
        %540 = vmatmul.mubr.f32.gmra.mrb[0].mxu0 %v470
        %v541 = vpop.f32.mrb[0].mxu0
        %v542 = vadd.f32 %v466, %v541
        %v543 = vpop.f32.mrb[0].mxu0
        %544 = vmatprep.mubr.f32.mxu0 0.0
        %545 = vmatmul.mubr.f32.gmra.mrb[0].mxu0 %v473
        %v546 = vpop.f32.mrb[0].mxu0
        %v547 = vadd.f32 %v466, %v546
        %v548 = vpop.f32.mrb[0].mxu0
        %549 = vdwg.mxu0
        %v550 = vadd.f32 %v304, %v542
        %v551 = vadd.f32 %v305, %v547
        %v552 = vld [vmem:[%s5] sm:$0xff]
        %v553 = vld [vmem:[%s5 + $0x8] sm:$0xff]
        %vm554 = vcmask 130048
        %v556 = vsel %vm554, %v552, 0
        %v559 = vsel %vm554, %v553, 0
        %561 = vmatprep.subr.mxu0 0.0
        %562 = vmatpush1.msra.mxu0 %v550
        %563 = vmatprep.subr.mxu0 0.0
        %564 = vmatpush1.msra.mxu0 %v551
        %565 = vmatprep.subr.mxu0 0.0
        %566 = vmatpush1.msra.mxu0 0.0
        %567 = vmatprep.subr.mxu0 0.0
        %568 = vmatpush1.msra.mxu0 0.0
        %569 = vmatprep.subr.mxu0 0.0
        %570 = vmatpush1.msra.mxu0 0.0
        %571 = vmatprep.subr.mxu0 0.0
        %572 = vmatpush1.msra.mxu0 0.0
        %573 = vmatprep.subr.mxu0 0.0
        %574 = vmatpush1.msra.mxu0 0.0
        %575 = vmatprep.subr.mxu0 0.0
        %576 = vmatpush1.msra.mxu0 0.0
        %577 = vmatprep.subr.mxu0 0.0
        %578 = vmatpush1.msra.mxu0 0.0
        %579 = vmatprep.subr.mxu0 0.0
        %580 = vmatpush1.msra.mxu0 0.0
        %581 = vmatprep.subr.mxu0 0.0
        %582 = vmatpush1.msra.mxu0 0.0
        %583 = vmatprep.subr.mxu0 0.0
        %584 = vmatpush1.msra.mxu0 0.0
        %585 = vmatprep.subr.mxu0 0.0
        %586 = vmatpush1.msra.mxu0 0.0
        %587 = vmatprep.subr.mxu0 0.0
        %588 = vmatpush1.msra.mxu0 0.0
        %589 = vmatprep.subr.mxu0 0.0
        %590 = vmatpush1.msra.mxu0 0.0
        %591 = vmatprep.subr.mxu0 0.0
        %592 = vmatpush1.msra.mxu0 0.0
        %593 = vmatprep.subr.mxu0 0.0
        %594 = vmatpush1.msra.mxu0 0.0
        %595 = vmatprep.subr.mxu0 0.0
        %596 = vmatpush1.msra.mxu0 0.0
        %597 = vmatprep.subr.mxu0 0.0
        %598 = vmatpush1.msra.mxu0 0.0
        %599 = vmatprep.subr.mxu0 0.0
        %600 = vmatpush1.msra.mxu0 0.0
        %601 = vmatprep.subr.mxu0 0.0
        %602 = vmatpush1.msra.mxu0 0.0
        %603 = vmatprep.subr.mxu0 0.0
        %604 = vmatpush1.msra.mxu0 0.0
        %605 = vmatprep.subr.mxu0 0.0
        %606 = vmatpush1.msra.mxu0 0.0
        %607 = vmatprep.subr.mxu0 0.0
        %608 = vmatpush1.msra.mxu0 0.0
        %609 = vmatprep.subr.mxu0 0.0
        %610 = vmatpush1.msra.mxu0 0.0
        %611 = vmatprep.subr.mxu0 0.0
        %612 = vmatpush1.msra.mxu0 0.0
        %613 = vmatprep.subr.mxu0 0.0
        %614 = vmatpush1.msra.mxu0 0.0
        %615 = vmatprep.subr.mxu0 0.0
        %616 = vmatpush1.msra.mxu0 0.0
        %617 = vmatprep.subr.mxu0 0.0
        %618 = vmatpush1.msra.mxu0 0.0
        %619 = vmatprep.subr.mxu0 0.0
        %620 = vmatpush1.msra.mxu0 0.0
        %621 = vmatprep.subr.mxu0 0.0
        %622 = vmatpush1.msra.mxu0 0.0
        %623 = vmatprep.subr.mxu0 0.0
        %624 = vmatpush1.msra.mxu0 0.0
        %625 = vmatprep.mubr.f32.mxu0 0.0
        %626 = vmatmul.mubr.f32.gmra.mrb[0].mxu0 %v556
        %v627 = vpop.f32.mrb[0].mxu0
        %v628 = vadd.f32 0.0, %v627
        %v629 = vpop.f32.mrb[0].mxu0
        %630 = vmatprep.mubr.f32.mxu0 0.0
        %631 = vmatmul.mubr.f32.gmra.mrb[0].mxu0 %v559
        %v632 = vpop.f32.mrb[0].mxu0
        %v633 = vadd.f32 0.0, %v632
        %v634 = vpop.f32.mrb[0].mxu0
        %635 = vdwg.mxu0
        %v636 = vsub.f32 %v550, %v628
        %v637 = vsub.f32 %v551, %v633
        %v638 = vsel %vm317, %v636, 0.0
        %639 = vadd.xlane.f32.xlu0 %v638
        %v640 = vpop.xlane.xlu0 %639
        %v641 = vsel %vm317, %v637, 0.0
        %642 = vadd.xlane.f32.xlu0 %v641
        %v643 = vpop.xlane.xlu0 %642
        %v644 = vrcp.pop 32.0
        %v645 = vmul.f32 %v640, %v644
        %v646 = vmul.f32 %v643, %v644
        %v647 = vsub.f32 %v636, %v645
        %v648 = vsub.f32 %v637, %v646
        %v649 = vmul.f32 %v647, %v647
        %v650 = vmul.f32 %v648, %v648
        %v651 = vsel %vm317, %v649, 0.0
        %652 = vadd.xlane.f32.xlu0 %v651
        %v653 = vpop.xlane.xlu0 %652
        %v654 = vsel %vm317, %v650, 0.0
        %655 = vadd.xlane.f32.xlu0 %v654
        %v656 = vpop.xlane.xlu0 %655
        %v657 = vmul.f32 %v653, %v644
        %v658 = vmul.f32 %v656, %v644
        %v659 = vadd.f32 %v657, 1e-05
        %v660 = vadd.f32 %v658, 1e-05
        %v661 = vrsqrt.pop %v659
        %v662 = vrsqrt.pop %v660
        %v663 = vmul.f32 %v647, %v661
        %v664 = vmul.f32 %v648, %v662
        %v665 = vld [vmem:[%s6] sm:$0x1]
        %v667 = vlaneseq
        %v668 = vshrl.u32 %v667, 7
        %v669 = vsub.s32 0, %v668
        %v670 = vrot.slane %v665, %v669
        %v672 = vmul.f32 %v663, %v670
        %v673 = vmul.f32 %v664, %v670
        %v674 = vld [vmem:[%s7] sm:$0x1]
        %v676 = vlaneseq
        %v677 = vshrl.u32 %v676, 7
        %v678 = vsub.s32 0, %v677
        %v679 = vrot.slane %v674, %v678
        %v681 = vadd.f32 %v672, %v679
        %v682 = vadd.f32 %v673, %v679
        %v683 = vsel %vm317, %v681, 0.0
        %v684 = vsel %vm317, %v682, 0.0
        %v685 = vadd.f32 %v683, %v684
        %v686 = vrot.slane %v685, 4
        %v687 = vadd.f32 %v685, %v686
        %v688 = vrot.slane %v687, 2
        %v689 = vadd.f32 %v687, %v688
        %v690 = vrot.slane %v689, 1
        %v691 = vadd.f32 %v689, %v690
        %v692 = vrcp.pop 16.0
        %v693 = vmul.f32 %v691, %v692
        %v694 = vsub.f32 %v681, %v693
        %v695 = vsub.f32 %v682, %v693
        %696 = vst.msk [vmem:[%s298] sm:$0xff] %vm317, %v694
        %697 = vst.msk [vmem:[%s298 + $0x8] sm:$0xff] %vm317, %v695
        %s698 = sand.u32 %s203, 1
        %s699 = scalar_lea.sflag [#allocation3], %s698
        %s700 = sand.u32 %s203, 1
        %s701 = smul.addr %s700, 16
        %s702 = scalar_lea.vmem [#allocation2], %s701
        // Predicated region
        $region53: #{_lambda_.5} parent=51 // pred_check
          %p703 = pneg %p213
        $region54: #{_lambda_.5} parent=51 // pred_check_branch
          %705 = sbr.rel (%p703) target = $region56
        $region55: #{_lambda_.5} parent=51 // pred_region
          %s707 = ssub.s32 256, 256
          %708 = vsyncadd %s699, %s707
          %s709 = smul.addr %s22, 2
          %s710 = smul.addr %s709, 128
          %s711 = scalar_lea.hbm %s8, %s710
          %s712 = sshll.u32 %s702, 4
          %s713 = int_to_ptr.vmem [resolvable:$true] %s712
          %718 = dma.vmem_to_hbm [thread:$0]  %s713, 256, %s711, %s699, 128, 128, 8
        $region56: #{_lambda_.5} parent=51 // pred_fallthru
          _
      $region52: #{_lambda_.5} parent=5 // pred_fallthru
        _
      %p719 = scmp.le.s32.totalorder 2, %s17
      // Predicated region
      $region57: #{_lambda_.5} parent=5 // pred_check
        %p720 = pneg %p719
      $region58: #{_lambda_.5} parent=5 // pred_check_branch
        %722 = sbr.rel (%p720) target = $region60
      $region59: #{_lambda_.5} parent=5 // pred_region
        %s723 = ssub.s32 %s17, 2
        // Predicated region
        $region61: #{_lambda_.5} parent=59 // pred_check
          %p724 = pneg %p219
        $region62: #{_lambda_.5} parent=59 // pred_check_branch
          %726 = sbr.rel (%p724) target = $region64
        $region63: #{_lambda_.5} parent=59 // pred_region
          %s727 = sand.u32 %s204, 1
          %s728 = scalar_lea.sflag [#allocation3], %s727
          %s729 = sand.u32 %s204, 1
          %s730 = smul.addr %s729, 16
          %s731 = scalar_lea.vmem [#allocation2], %s730
          %732 = dma.done %s728, 256
        $region64: #{_lambda_.5} parent=59 // pred_fallthru
          _
      $region60: #{_lambda_.5} parent=5 // pred_fallthru
        _
    $region6: #{_lambda_.5} parent=1 // loop_footer
      %s21 = sadd.s32 1, %s17
    $region7: #{_lambda_.5} parent=1 // loop_footer_branch
      %16 = sbr.rel target = $region3
    $region8: #{_lambda_.5} parent=1 // loop_exit
      _
    %733 = vsyncpa [#allocation3], 1
    %s734 = scalar_lea.sflag [#allocation3], 1
    %735 = vsyncpa %s734, 1

</llo_original>
